<compile_context>
chip_gen: v7x
topology: tpu7x:2x2x1
jax: 0.10.0
libtpu: 0.0.40
codegen_flags: <defaults>
</compile_context>

<pallas_src>
import functools

import jax
import jax.numpy as jnp
from jax.experimental import pallas as pl
from jax.experimental.pallas import tpu as pltpu


def _tile(dim, pref):
    """Use the preferred tile if it evenly divides `dim`, else the full dim."""
    return pref if dim % pref == 0 else dim


def _tpu_config():
    """Per-generation VMEM budget / tile sizes / attention lane target."""
    kind = ""
    try:
        kind = jax.devices()[0].device_kind.lower()
    except Exception:
        pass
    if "v7" in kind:      # 64 MiB VMEM per TC -> keep headroom
        return {"vmem": 48 * 2**20, "tm": 256, "lane_target": 256, "tq": 256}
    if "v6" in kind:      # 128 MiB VMEM
        return {"vmem": 96 * 2**20, "tm": 512, "lane_target": 256, "tq": 256}
    if "v5" in kind or "v4" in kind:   # 128 MiB VMEM, 128-wide MXU
        return {"vmem": 96 * 2**20, "tm": 512, "lane_target": 128, "tq": 256}
    # Unknown part: stay conservative.
    return {"vmem": 32 * 2**20, "tm": 256, "lane_target": 128, "tq": 256}


def _const_spec(shape, index_map):
    """BlockSpec for a grid-invariant operand: single-buffered when supported."""
    if hasattr(pl, "Buffered"):
        try:
            return pl.BlockSpec(shape, index_map, pipeline_mode=pl.Buffered(1))
        except TypeError:
            pass
    return pl.BlockSpec(shape, index_map)


# ----------------------------------------------------------------------------
# Kernel 1: fused LayerNorm + QKV projection (single (M, 3D) slab) + MLP-up
# ----------------------------------------------------------------------------
def _ln_qkv_mlpup_kernel(x_ref, g_ref, b_ref, wqkv_ref, bqkv_ref, w1_ref,
                         b1_ref, qkv_ref, h1_ref, *, eps):
    x = x_ref[...].astype(jnp.float32)                              # (tm, D)
    mu = jnp.mean(x, axis=-1, keepdims=True)
    var = jnp.mean((x - mu) ** 2, axis=-1, keepdims=True)
    h = (x - mu) * jax.lax.rsqrt(var + eps)
    h = h * g_ref[...].astype(jnp.float32) + b_ref[...].astype(jnp.float32)
    h = h.astype(wqkv_ref.dtype)                                    # bf16 MXU operand

    # One matmul against the concatenated (D, 3D) QKV weight; single
    # lane-dense (tm, 3D) store (no sliced q/k/v stores).
    qkv = jnp.dot(h, wqkv_ref[...], preferred_element_type=jnp.float32)
    qkv_ref[...] = (qkv + bqkv_ref[...].astype(jnp.float32)).astype(qkv_ref.dtype)

    # MLP up-projection from the same (never-materialized) normalized h.
    h1 = jnp.dot(h, w1_ref[...], preferred_element_type=jnp.float32)
    h1_ref[...] = (h1 + b1_ref[...].astype(jnp.float32)).astype(h1_ref.dtype)


def ln_qkv_mlpup(x, gamma, beta, wqkv, bqkv, w1, b1, *, eps=1e-5, tm=256,
                 vmem=32 * 2**20):
    M, D = x.shape
    F = w1.shape[1]
    tm = _tile(M, tm)
    out_shape = (
        jax.ShapeDtypeStruct((M, 3 * D), x.dtype),   # qkv slab
        jax.ShapeDtypeStruct((M, F), x.dtype),       # h1 (pre-GELU)
    )
    return pl.pallas_call(
        functools.partial(_ln_qkv_mlpup_kernel, eps=eps),
        out_shape=out_shape,
        grid=(M // tm,),
        in_specs=[
            pl.BlockSpec((tm, D), lambda i: (i, 0)),
            _const_spec((1, D), lambda i: (0, 0)),
            _const_spec((1, D), lambda i: (0, 0)),
            _const_spec((D, 3 * D), lambda i: (0, 0)),
            _const_spec((1, 3 * D), lambda i: (0, 0)),
            _const_spec((D, F), lambda i: (0, 0)),
            _const_spec((1, F), lambda i: (0, 0)),
        ],
        out_specs=(
            pl.BlockSpec((tm, 3 * D), lambda i: (i, 0)),
            pl.BlockSpec((tm, F), lambda i: (i, 0)),
        ),
        compiler_params=pltpu.CompilerParams(
            dimension_semantics=("parallel",),
            vmem_limit_bytes=vmem),
    )(x, gamma.reshape(1, D), beta.reshape(1, D), wqkv, bqkv.reshape(1, 3 * D),
      w1, b1.reshape(1, F))


# ----------------------------------------------------------------------------
# Kernel 2: causal + padding-masked attention (query-tiled, lane-dense I/O)
# ----------------------------------------------------------------------------
def _attn_kernel(q_ref, k_ref, v_ref, m_ref, o_ref, *, scale, heads_per_block,
                 head_dim):
    tq = q_ref.shape[1]
    S = k_ref.shape[1]
    hd = head_dim
    qi = pl.program_id(2)

    # Fold 1/sqrt(hd) into q (a (tq, cw) pass instead of a (tq, S) pass).
    q = (q_ref[0].astype(jnp.float32) * scale).astype(k_ref.dtype)   # (tq, cw)
    k = k_ref[0]                                                      # (S, cw)
    v = v_ref[0]                                                      # (S, cw)

    row = qi * tq + jax.lax.broadcasted_iota(jnp.int32, (tq, S), 0)
    col = jax.lax.broadcasted_iota(jnp.int32, (tq, S), 1)
    allowed = jnp.logical_and(col <= row, m_ref[0] > 0.5)             # (tq, S)

    for hh in range(heads_per_block):                 # small static loop
        sl = slice(hh * hd, (hh + 1) * hd)
        # fp32 score/softmax math; bf16 MXU operands.
        s = jnp.einsum('qd,kd->qk', q[:, sl], k[:, sl],
                       preferred_element_type=jnp.float32)
        s = jnp.where(allowed, s, -1e30)
        s = s - jnp.max(s, axis=-1, keepdims=True)
        p = jnp.exp(s)
        p = p * pl.reciprocal(jnp.sum(p, axis=-1, keepdims=True), approx=True)
        o = jnp.einsum('qk,kd->qd', p.astype(v.dtype), v[:, sl],
                       preferred_element_type=jnp.float32)
        # Direct per-head store into the output slab (no concatenate temp).
        o_ref[0, :, sl] = o.astype(o_ref.dtype)


def attention(qkv, mask, *, num_heads, batch, seq, lane_target=128,
              tq_pref=256, vmem=32 * 2**20):
    # qkv: (B*S, 3D) slab [Q | K | V]; mask: (B, 1, S) float (1 = keep, 0 = pad)
    B, S = batch, seq
    three_d = qkv.shape[-1]
    D = three_d // 3
    hd = D // num_heads

    # Pick a head block so q/k/v/o blocks hit the per-generation lane target.
    hb = num_heads
    while hb > 1 and (hb // 2) * hd >= lane_target:
        hb //= 2
    cw = hb * hd
    nhb = num_heads // hb
    tq = _tile(S, tq_pref)
    nqt = S // tq
    scale = 1.0 / float(hd) ** 0.5

    qkv3 = qkv.reshape(B, S, three_d)                # free reshape
    use_slab = (cw % 128 == 0) and (D % cw == 0)
    if use_slab:
        # Index q/k/v head-blocks straight out of the concatenated slab.
        q_in = k_in = v_in = qkv3
        k_off, v_off = D // cw, 2 * (D // cw)
        q_spec = pl.BlockSpec((1, tq, cw), lambda b, h, qi: (b, qi, h))
        k_spec = pl.BlockSpec((1, S, cw), lambda b, h, qi: (b, 0, k_off + h))
        v_spec = pl.BlockSpec((1, S, cw), lambda b, h, qi: (b, 0, v_off + h))
    else:
        # Small-model fallback (D < 128): head-block columns are not
        # lane-aligned against the 3D-wide slab, so split in plain JAX.
        q_in = qkv3[:, :, :D]
        k_in = qkv3[:, :, D:2 * D]
        v_in = qkv3[:, :, 2 * D:]
        q_spec = pl.BlockSpec((1, tq, cw), lambda b, h, qi: (b, qi, h))
        k_spec = pl.BlockSpec((1, S, cw), lambda b, h, qi: (b, 0, h))
        v_spec = pl.BlockSpec((1, S, cw), lambda b, h, qi: (b, 0, h))

    # Grid order (b, head-block, q-tile): K/V (and the mask) have constant
    # block indices across the innermost q-tile axis -> not re-DMA'd.
    return pl.pallas_call(
        functools.partial(_attn_kernel, scale=scale, heads_per_block=hb,
                          head_dim=hd),
        out_shape=jax.ShapeDtypeStruct((B, S, D), qkv.dtype),
        grid=(B, nhb, nqt),
        in_specs=[q_spec, k_spec, v_spec,
                  pl.BlockSpec((1, 1, S), lambda b, h, qi: (b, 0, 0))],
        out_specs=pl.BlockSpec((1, tq, cw), lambda b, h, qi: (b, qi, h)),
        compiler_params=pltpu.CompilerParams(
            dimension_semantics=("parallel", "parallel", "parallel"),
            vmem_limit_bytes=vmem),
    )(q_in, k_in, v_in, mask)


# ----------------------------------------------------------------------------
# Kernel 3: fused attn@Wo + gelu(h1)@W2 + residual add  (full-D output rows)
# ----------------------------------------------------------------------------
def _attn_mlp_residual_kernel(xr_ref, a_ref, wo_ref, bo_ref, h1_ref, w2_ref,
                              b2_ref, o_ref):
    acc = jnp.dot(a_ref[...], wo_ref[...], preferred_element_type=jnp.float32)
    acc = acc + bo_ref[...].astype(jnp.float32)
    # CodeGen uses gelu_new (tanh approx); activation math in fp32, once per row tile.
    h = jax.nn.gelu(h1_ref[...].astype(jnp.float32), approximate=True)
    acc = acc + jnp.dot(h.astype(w2_ref.dtype), w2_ref[...],
                        preferred_element_type=jnp.float32)
    acc = acc + b2_ref[...].astype(jnp.float32)
    # GPT-J / CodeGen parallel residual: x + attn(ln(x)) + mlp(ln(x))
    o_ref[...] = (xr_ref[...].astype(jnp.float32) + acc).astype(o_ref.dtype)


def attn_mlp_residual(x, attn, wo, bo, h1, w2, b2, *, tm=256, vmem=32 * 2**20):
    M, D = x.shape
    F = h1.shape[1]
    tm = _tile(M, tm)
    return pl.pallas_call(
        _attn_mlp_residual_kernel,
        out_shape=jax.ShapeDtypeStruct((M, D), x.dtype),
        grid=(M // tm,),
        in_specs=[
            pl.BlockSpec((tm, D), lambda i: (i, 0)),   # residual x
            pl.BlockSpec((tm, D), lambda i: (i, 0)),   # attention output
            _const_spec((D, D), lambda i: (0, 0)),     # wo (resident)
            _const_spec((1, D), lambda i: (0, 0)),     # bo
            pl.BlockSpec((tm, F), lambda i: (i, 0)),   # h1 (pre-GELU)
            _const_spec((F, D), lambda i: (0, 0)),     # w2 (resident)
            _const_spec((1, D), lambda i: (0, 0)),     # b2
        ],
        out_specs=pl.BlockSpec((tm, D), lambda i: (i, 0)),
        compiler_params=pltpu.CompilerParams(
            dimension_semantics=("parallel",),
            vmem_limit_bytes=vmem),
    )(x, attn, wo, bo.reshape(1, D), h1, w2, b2.reshape(1, D))


# ----------------------------------------------------------------------------
# Kernel 4: fused final LayerNorm + mean pooling over the sequence axis
# ----------------------------------------------------------------------------
def _lnf_meanpool_kernel(x_ref, g_ref, b_ref, o_ref, acc_ref, *, eps, inv_s):
    @pl.when(pl.program_id(1) == 0)
    def _():
        acc_ref[...] = jnp.zeros_like(acc_ref)

    x = x_ref[0].astype(jnp.float32)                      # (ts, D)
    mu = jnp.mean(x, axis=-1, keepdims=True)
    var = jnp.mean((x - mu) ** 2, axis=-1, keepdims=True)
    xn = (x - mu) * jax.lax.rsqrt(var + eps)
    y = xn * g_ref[...].astype(jnp.float32) + b_ref[...].astype(jnp.float32)
    acc_ref[...] += jnp.sum(y, axis=0, keepdims=True)     # (1, D)

    @pl.when(pl.program_id(1) == pl.num_programs(1) - 1)
    def _():
        # Encoder.forward: plain mean over seq (includes padded positions).
        o_ref[0] = (acc_ref[...] * inv_s).astype(o_ref.dtype)


def final_ln_meanpool(x, gamma, beta, *, eps=1e-5, ts=256, vmem=32 * 2**20):
    B, S, D = x.shape
    ts = _tile(S, ts)
    out = pl.pallas_call(
        functools.partial(_lnf_meanpool_kernel, eps=eps, inv_s=1.0 / S),
        out_shape=jax.ShapeDtypeStruct((B, 1, D), jnp.float32),
        grid=(B, S // ts),
        in_specs=[
            pl.BlockSpec((1, ts, D), lambda b, s: (b, s, 0)),
            _const_spec((1, D), lambda b, s: (0, 0)),
            _const_spec((1, D), lambda b, s: (0, 0)),
        ],
        out_specs=pl.BlockSpec((1, 1, D), lambda b, s: (b, 0, 0)),
        scratch_shapes=[pltpu.VMEM((1, D), jnp.float32)],
        compiler_params=pltpu.CompilerParams(
            dimension_semantics=("parallel", "arbitrary"),
            vmem_limit_bytes=vmem),
    )(x, gamma.reshape(1, D), beta.reshape(1, D))
    return out.reshape(B, D)


# ----------------------------------------------------------------------------
# Synthetic CodeGen-style model (glue in plain JAX, compute in Pallas)
# ----------------------------------------------------------------------------
def init_params(key, vocab, D, H, n_layers, F):
    def nrm(k, shape, scale=0.02):
        return (scale * jax.random.normal(k, shape, dtype=jnp.float32)
                ).astype(jnp.bfloat16)

    keys = jax.random.split(key, 1 + n_layers)
    params = {
        "wte": nrm(keys[0], (vocab, D)),
        "lnf_g": jnp.ones((D,), jnp.float32),
        "lnf_b": jnp.zeros((D,), jnp.float32),
        "layers": [],
    }
    for li in range(n_layers):
        ks = jax.random.split(keys[1 + li], 6)
        wq, wk, wv = nrm(ks[0], (D, D)), nrm(ks[1], (D, D)), nrm(ks[2], (D, D))
        params["layers"].append({
            "ln_g": jnp.ones((D,), jnp.float32),
            "ln_b": jnp.zeros((D,), jnp.float32),
            "wqkv": jnp.concatenate([wq, wk, wv], axis=1),     # (D, 3D) bf16
            "bqkv": jnp.zeros((3 * D,), jnp.float32),
            "wo": nrm(ks[3], (D, D)), "bo": jnp.zeros((D,), jnp.float32),
            "w1": nrm(ks[4], (D, F)), "b1": jnp.zeros((F,), jnp.float32),
            "w2": nrm(ks[5], (F, D)), "b2": jnp.zeros((D,), jnp.float32),
        })
    return params


def encoder_forward(params, input_ids, attention_mask, *, num_heads):
    """Equivalent of Encoder.forward: model(...).last_hidden_state.mean(dim=1)."""
    B, S = input_ids.shape
    D = params["wte"].shape[1]
    M = B * S
    cfg = _tpu_config()          # trace-time, per-generation tuning

    # Embedding lookup (glue). Activations stay bf16.
    x = jnp.take(params["wte"], input_ids, axis=0).reshape(M, D)   # (M, D)
    mask = attention_mask.astype(jnp.float32).reshape(B, 1, S)

    # TODO(synk): rotary position embeddings of CodeGen are omitted in this
    # synthetic reimplementation.
    for layer in params["layers"]:
        qkv, h1 = ln_qkv_mlpup(
            x, layer["ln_g"], layer["ln_b"],
            layer["wqkv"], layer["bqkv"], layer["w1"], layer["b1"],
            tm=cfg["tm"], vmem=cfg["vmem"])

        a = attention(qkv, mask, num_heads=num_heads, batch=B, seq=S,
                      lane_target=cfg["lane_target"], tq_pref=cfg["tq"],
                      vmem=cfg["vmem"])

        x = attn_mlp_residual(x, a.reshape(M, D), layer["wo"], layer["bo"],
                              h1, layer["w2"], layer["b2"],
                              tm=cfg["tm"], vmem=cfg["vmem"])

    return final_ln_meanpool(x.reshape(B, S, D),
                             params["lnf_g"], params["lnf_b"],
                             vmem=cfg["vmem"])                     # (B, D)


# ----------------------------------------------------------------------------
if __name__ == "__main__":
    B, S, D, H, F, L, VOCAB = 2, 8, 32, 4, 128, 2, 64

    key = jax.random.PRNGKey(0)
    k_par, k_ids = jax.random.split(key)

    params = init_params(k_par, VOCAB, D, H, L, F)
    input_ids = jax.random.randint(k_ids, (B, S), 0, VOCAB, dtype=jnp.int32)
    attention_mask = jnp.array(
        [[1, 1, 1, 1, 1, 1, 1, 1],
         [1, 1, 1, 1, 1, 1, 0, 0]], dtype=jnp.int32)

    fwd = jax.jit(functools.partial(encoder_forward, num_heads=H))
    out = fwd(params, input_ids, attention_mask)
    jax.block_until_ready(out)

    assert out.shape == (B, D), out.shape
    assert jnp.all(jnp.isfinite(out)), "non-finite output"
    print("KERNEL_OK")
</pallas_src>

<mosaic_0001>
module attributes {stable_mosaic.version = 11 : i64} {
  func.func @_ln_qkv_mlpup_kernel(%arg0: i32, %arg1: memref<16x32xbf16, #tpu.memory_space<vmem>>, %arg2: memref<1x32xf32, #tpu.memory_space<vmem>>, %arg3: memref<1x32xf32, #tpu.memory_space<vmem>>, %arg4: memref<32x96xbf16, #tpu.memory_space<vmem>>, %arg5: memref<1x96xf32, #tpu.memory_space<vmem>>, %arg6: memref<32x128xbf16, #tpu.memory_space<vmem>>, %arg7: memref<1x128xf32, #tpu.memory_space<vmem>>, %arg8: memref<16x96xbf16, #tpu.memory_space<vmem>>, %arg9: memref<16x128xbf16, #tpu.memory_space<vmem>>) attributes {dimension_semantics = [#tpu.dimension_semantics<parallel>], iteration_bounds = array<i64: 1>, scalar_prefetch = 0 : i64, scratch_operands = 0 : i64, tpu.core_type = #tpu.core_type<tc>, window_params = [{transform_indices = @transform_0, window_bounds = array<i64: 16, 32>}, {pipeline_mode = #tpu.pipeline_mode<synchronous>, transform_indices = @transform_1, window_bounds = array<i64: 1, 32>}, {pipeline_mode = #tpu.pipeline_mode<synchronous>, transform_indices = @transform_2, window_bounds = array<i64: 1, 32>}, {pipeline_mode = #tpu.pipeline_mode<synchronous>, transform_indices = @transform_3, window_bounds = array<i64: 32, 96>}, {pipeline_mode = #tpu.pipeline_mode<synchronous>, transform_indices = @transform_4, window_bounds = array<i64: 1, 96>}, {pipeline_mode = #tpu.pipeline_mode<synchronous>, transform_indices = @transform_5, window_bounds = array<i64: 32, 128>}, {pipeline_mode = #tpu.pipeline_mode<synchronous>, transform_indices = @transform_6, window_bounds = array<i64: 1, 128>}, {transform_indices = @transform_7, window_bounds = array<i64: 16, 96>}, {transform_indices = @transform_8, window_bounds = array<i64: 16, 128>}]} {
    %c0 = arith.constant 0 : index
    %c0_0 = arith.constant 0 : index
    %0 = vector.load %arg1[%c0, %c0_0] : memref<16x32xbf16, #tpu.memory_space<vmem>>, vector<16x32xbf16>
    %1 = arith.extf %0 : vector<16x32xbf16> to vector<16x32xf32>
    %cst = arith.constant dense<0.000000e+00> : vector<16xf32>
    %2 = vector.multi_reduction <add>, %1, %cst [1] : vector<16x32xf32> to vector<16xf32>
    %3 = vector.shape_cast %2 : vector<16xf32> to vector<16x1xf32>
    %cst_1 = arith.constant 3.200000e+01 : f32
    %4 = vector.broadcast %cst_1 : f32 to vector<16x1xf32>
    %5 = arith.divf %3, %4 : vector<16x1xf32>
    %6 = vector.broadcast %5 : vector<16x1xf32> to vector<16x32xf32>
    %7 = arith.subf %1, %6 : vector<16x32xf32>
    %8 = arith.mulf %7, %7 : vector<16x32xf32>
    %cst_2 = arith.constant dense<0.000000e+00> : vector<16xf32>
    %9 = vector.multi_reduction <add>, %8, %cst_2 [1] : vector<16x32xf32> to vector<16xf32>
    %10 = vector.shape_cast %9 : vector<16xf32> to vector<16x1xf32>
    %cst_3 = arith.constant 3.200000e+01 : f32
    %11 = vector.broadcast %cst_3 : f32 to vector<16x1xf32>
    %12 = arith.divf %10, %11 : vector<16x1xf32>
    %13 = vector.broadcast %5 : vector<16x1xf32> to vector<16x32xf32>
    %14 = arith.subf %1, %13 : vector<16x32xf32>
    %cst_4 = arith.constant 9.99999974E-6 : f32
    %15 = vector.broadcast %cst_4 : f32 to vector<16x1xf32>
    %16 = arith.addf %12, %15 : vector<16x1xf32>
    %17 = math.rsqrt %16 : vector<16x1xf32>
    %18 = vector.broadcast %17 : vector<16x1xf32> to vector<16x32xf32>
    %19 = arith.mulf %14, %18 : vector<16x32xf32>
    %c0_5 = arith.constant 0 : index
    %c0_6 = arith.constant 0 : index
    %20 = vector.load %arg2[%c0_5, %c0_6] : memref<1x32xf32, #tpu.memory_space<vmem>>, vector<1x32xf32>
    %21 = vector.broadcast %20 : vector<1x32xf32> to vector<16x32xf32>
    %22 = arith.mulf %19, %21 : vector<16x32xf32>
    %c0_7 = arith.constant 0 : index
    %c0_8 = arith.constant 0 : index
    %23 = vector.load %arg3[%c0_7, %c0_8] : memref<1x32xf32, #tpu.memory_space<vmem>>, vector<1x32xf32>
    %24 = vector.broadcast %23 : vector<1x32xf32> to vector<16x32xf32>
    %25 = arith.addf %22, %24 : vector<16x32xf32>
    %26 = arith.truncf %25 : vector<16x32xf32> to vector<16x32xbf16>
    %c0_9 = arith.constant 0 : index
    %c0_10 = arith.constant 0 : index
    %27 = vector.load %arg4[%c0_9, %c0_10] : memref<32x96xbf16, #tpu.memory_space<vmem>>, vector<32x96xbf16>
    %cst_11 = arith.constant dense<0.000000e+00> : vector<16x96xf32>
    %28 = tpu.matmul %26, %27, %cst_11 {dimension_numbers = #tpu.dot_dimension_numbers<[1], [0], [0], [1], [0, 0, 1, 1], [], []>} : vector<16x32xbf16>, vector<32x96xbf16>, vector<16x96xf32> -> vector<16x96xf32>
    %c0_12 = arith.constant 0 : index
    %c0_13 = arith.constant 0 : index
    %29 = vector.load %arg5[%c0_12, %c0_13] : memref<1x96xf32, #tpu.memory_space<vmem>>, vector<1x96xf32>
    %30 = vector.broadcast %29 : vector<1x96xf32> to vector<16x96xf32>
    %31 = arith.addf %28, %30 : vector<16x96xf32>
    %32 = arith.truncf %31 : vector<16x96xf32> to vector<16x96xbf16>
    %c0_14 = arith.constant 0 : index
    %c0_15 = arith.constant 0 : index
    %33 = vector.load %arg8[%c0_14, %c0_15] : memref<16x96xbf16, #tpu.memory_space<vmem>>, vector<16x96xbf16>
    tpu.vector_store %arg8[%c0_14, %c0_15], %32 {strides = array<i32>} : memref<16x96xbf16, #tpu.memory_space<vmem>>, vector<16x96xbf16>,
    %c0_16 = arith.constant 0 : index
    %c0_17 = arith.constant 0 : index
    %34 = vector.load %arg6[%c0_16, %c0_17] : memref<32x128xbf16, #tpu.memory_space<vmem>>, vector<32x128xbf16>
    %cst_18 = arith.constant dense<0.000000e+00> : vector<16x128xf32>
    %35 = tpu.matmul %26, %34, %cst_18 {dimension_numbers = #tpu.dot_dimension_numbers<[1], [0], [0], [1], [0, 0, 1, 1], [], []>} : vector<16x32xbf16>, vector<32x128xbf16>, vector<16x128xf32> -> vector<16x128xf32>
    %c0_19 = arith.constant 0 : index
    %c0_20 = arith.constant 0 : index
    %36 = vector.load %arg7[%c0_19, %c0_20] : memref<1x128xf32, #tpu.memory_space<vmem>>, vector<1x128xf32>
    %37 = vector.broadcast %36 : vector<1x128xf32> to vector<16x128xf32>
    %38 = arith.addf %35, %37 : vector<16x128xf32>
    %39 = arith.truncf %38 : vector<16x128xf32> to vector<16x128xbf16>
    %c0_21 = arith.constant 0 : index
    %c0_22 = arith.constant 0 : index
    %40 = vector.load %arg9[%c0_21, %c0_22] : memref<16x128xbf16, #tpu.memory_space<vmem>>, vector<16x128xbf16>
    tpu.vector_store %arg9[%c0_21, %c0_22], %39 {strides = array<i32>} : memref<16x128xbf16, #tpu.memory_space<vmem>>, vector<16x128xbf16>,
    return
  }
  func.func @transform_0(%arg0: i32) -> (i32, i32) {
    %c0_i32 = arith.constant 0 : i32
    %c0_i32_0 = arith.constant 0 : i32
    return %arg0, %c0_i32 : i32, i32
  }
  func.func @transform_1(%arg0: i32) -> (i32, i32) {
    %c0_i32 = arith.constant 0 : i32
    %c0_i32_0 = arith.constant 0 : i32
    %c0_i32_1 = arith.constant 0 : i32
    return %c0_i32, %c0_i32_0 : i32, i32
  }
  func.func @transform_2(%arg0: i32) -> (i32, i32) {
    %c0_i32 = arith.constant 0 : i32
    %c0_i32_0 = arith.constant 0 : i32
    %c0_i32_1 = arith.constant 0 : i32
    return %c0_i32, %c0_i32_0 : i32, i32
  }
  func.func @transform_3(%arg0: i32) -> (i32, i32) {
    %c0_i32 = arith.constant 0 : i32
    %c0_i32_0 = arith.constant 0 : i32
    %c0_i32_1 = arith.constant 0 : i32
    return %c0_i32, %c0_i32_0 : i32, i32
  }
  func.func @transform_4(%arg0: i32) -> (i32, i32) {
    %c0_i32 = arith.constant 0 : i32
    %c0_i32_0 = arith.constant 0 : i32
    %c0_i32_1 = arith.constant 0 : i32
    return %c0_i32, %c0_i32_0 : i32, i32
  }
  func.func @transform_5(%arg0: i32) -> (i32, i32) {
    %c0_i32 = arith.constant 0 : i32
    %c0_i32_0 = arith.constant 0 : i32
    %c0_i32_1 = arith.constant 0 : i32
    return %c0_i32, %c0_i32_0 : i32, i32
  }
  func.func @transform_6(%arg0: i32) -> (i32, i32) {
    %c0_i32 = arith.constant 0 : i32
    %c0_i32_0 = arith.constant 0 : i32
    %c0_i32_1 = arith.constant 0 : i32
    return %c0_i32, %c0_i32_0 : i32, i32
  }
  func.func @transform_7(%arg0: i32) -> (i32, i32) {
    %c0_i32 = arith.constant 0 : i32
    %c0_i32_0 = arith.constant 0 : i32
    return %arg0, %c0_i32 : i32, i32
  }
  func.func @transform_8(%arg0: i32) -> (i32, i32) {
    %c0_i32 = arith.constant 0 : i32
    %c0_i32_0 = arith.constant 0 : i32
    return %arg0, %c0_i32 : i32, i32
  }
}

module attributes {stable_mosaic.version = 11 : i64} {
  func.func @_attn_kernel(%arg0: i32, %arg1: i32, %arg2: i32, %arg3: memref<1x8x32xbf16, #tpu.memory_space<vmem>>, %arg4: memref<1x8x32xbf16, #tpu.memory_space<vmem>>, %arg5: memref<1x8x32xbf16, #tpu.memory_space<vmem>>, %arg6: memref<1x1x8xf32, #tpu.memory_space<vmem>>, %arg7: memref<1x8x32xbf16, #tpu.memory_space<vmem>>) attributes {dimension_semantics = [#tpu.dimension_semantics<parallel>, #tpu.dimension_semantics<parallel>, #tpu.dimension_semantics<parallel>], iteration_bounds = array<i64: 2, 1, 1>, scalar_prefetch = 0 : i64, scratch_operands = 0 : i64, tpu.core_type = #tpu.core_type<tc>, window_params = [{transform_indices = @transform_0, window_bounds = array<i64: 1, 8, 32>}, {transform_indices = @transform_1, window_bounds = array<i64: 1, 8, 32>}, {transform_indices = @transform_2, window_bounds = array<i64: 1, 8, 32>}, {transform_indices = @transform_3, window_bounds = array<i64: 1, 1, 8>}, {transform_indices = @transform_4, window_bounds = array<i64: 1, 8, 32>}]} {
    %c0 = arith.constant 0 : index
    %c0_0 = arith.constant 0 : index
    %c0_1 = arith.constant 0 : index
    %0 = vector.load %arg3[%c0, %c0_0, %c0_1] : memref<1x8x32xbf16, #tpu.memory_space<vmem>>, vector<1x8x32xbf16>
    %1 = vector.shape_cast %0 : vector<1x8x32xbf16> to vector<8x32xbf16>
    %2 = arith.extf %1 : vector<8x32xbf16> to vector<8x32xf32>
    %cst = arith.constant 0.353553385 : f32
    %3 = vector.broadcast %cst : f32 to vector<8x32xf32>
    %4 = arith.mulf %2, %3 : vector<8x32xf32>
    %5 = arith.truncf %4 : vector<8x32xf32> to vector<8x32xbf16>
    %c0_2 = arith.constant 0 : index
    %c0_3 = arith.constant 0 : index
    %c0_4 = arith.constant 0 : index
    %6 = vector.load %arg4[%c0_2, %c0_3, %c0_4] : memref<1x8x32xbf16, #tpu.memory_space<vmem>>, vector<1x8x32xbf16>
    %7 = vector.shape_cast %6 : vector<1x8x32xbf16> to vector<8x32xbf16>
    %c0_5 = arith.constant 0 : index
    %c0_6 = arith.constant 0 : index
    %c0_7 = arith.constant 0 : index
    %8 = vector.load %arg5[%c0_5, %c0_6, %c0_7] : memref<1x8x32xbf16, #tpu.memory_space<vmem>>, vector<1x8x32xbf16>
    %9 = vector.shape_cast %8 : vector<1x8x32xbf16> to vector<8x32xbf16>
    %c8_i32 = arith.constant 8 : i32
    %10 = arith.muli %arg2, %c8_i32 : i32
    %11 = tpu.iota {dimensions = array<i32: 0>} : vector<8x8xi32>
    %12 = vector.broadcast %10 : i32 to vector<8x8xi32>
    %13 = arith.addi %12, %11 : vector<8x8xi32>
    %14 = tpu.iota {dimensions = array<i32: 1>} : vector<8x8xi32>
    %15 = arith.cmpi sle, %14, %13 : vector<8x8xi32>
    %c0_8 = arith.constant 0 : index
    %c0_9 = arith.constant 0 : index
    %c0_10 = arith.constant 0 : index
    %16 = vector.load %arg6[%c0_8, %c0_9, %c0_10] : memref<1x1x8xf32, #tpu.memory_space<vmem>>, vector<1x1x8xf32>
    %17 = vector.shape_cast %16 : vector<1x1x8xf32> to vector<1x8xf32>
    %cst_11 = arith.constant 5.000000e-01 : f32
    %18 = vector.broadcast %cst_11 : f32 to vector<1x8xf32>
    %19 = arith.cmpf ogt, %17, %18 : vector<1x8xf32>
    %20 = vector.broadcast %19 : vector<1x8xi1> to vector<8x8xi1>
    %21 = arith.andi %15, %20 : vector<8x8xi1>
    %22 = vector.extract_strided_slice %5 {offsets = [0, 0], sizes = [8, 8], strides = [1, 1]} : vector<8x32xbf16> to vector<8x8xbf16>
    %23 = vector.extract_strided_slice %7 {offsets = [0, 0], sizes = [8, 8], strides = [1, 1]} : vector<8x32xbf16> to vector<8x8xbf16>
    "tpu.trace_start"() <{level = 10 : i32, message = "qd,kd->qk"}> : () -> ()
    %cst_12 = arith.constant dense<0.000000e+00> : vector<8x8xf32>
    %24 = tpu.matmul %22, %23, %cst_12 {dimension_numbers = #tpu.dot_dimension_numbers<[1], [1], [0], [0], [0, 0, 1, 0], [], []>} : vector<8x8xbf16>, vector<8x8xbf16>, vector<8x8xf32> -> vector<8x8xf32>
    %cst_13 = arith.constant -1.000000e+30 : f32
    "tpu.trace_stop"() : () -> ()
    %25 = vector.broadcast %cst_13 : f32 to vector<8x8xf32>
    %26 = arith.select %21, %24, %25 : vector<8x8xi1>, vector<8x8xf32>
    %cst_14 = arith.constant dense<0xFF800000> : vector<8xf32>
    %27 = vector.multi_reduction <maximumf>, %26, %cst_14 [1] : vector<8x8xf32> to vector<8xf32>
    %28 = vector.shape_cast %27 : vector<8xf32> to vector<8x1xf32>
    %29 = vector.broadcast %28 : vector<8x1xf32> to vector<8x8xf32>
    %30 = arith.subf %26, %29 : vector<8x8xf32>
    %31 = math.exp %30 : vector<8x8xf32>
    %cst_15 = arith.constant dense<0.000000e+00> : vector<8xf32>
    %32 = vector.multi_reduction <add>, %31, %cst_15 [1] : vector<8x8xf32> to vector<8xf32>
    %33 = vector.shape_cast %32 : vector<8xf32> to vector<8x1xf32>
    %34 = tpu.reciprocal %33 {approx = true} : vector<8x1xf32> -> vector<8x1xf32>
    %35 = vector.broadcast %34 : vector<8x1xf32> to vector<8x8xf32>
    %36 = arith.mulf %31, %35 : vector<8x8xf32>
    %37 = arith.truncf %36 : vector<8x8xf32> to vector<8x8xbf16>
    %38 = vector.extract_strided_slice %9 {offsets = [0, 0], sizes = [8, 8], strides = [1, 1]} : vector<8x32xbf16> to vector<8x8xbf16>
    "tpu.trace_start"() <{level = 10 : i32, message = "qk,kd->qd"}> : () -> ()
    %cst_16 = arith.constant dense<0.000000e+00> : vector<8x8xf32>
    %39 = tpu.matmul %37, %38, %cst_16 {dimension_numbers = #tpu.dot_dimension_numbers<[1], [0], [0], [1], [0, 0, 1, 1], [], []>} : vector<8x8xbf16>, vector<8x8xbf16>, vector<8x8xf32> -> vector<8x8xf32>
    "tpu.trace_stop"() : () -> ()
    %40 = arith.truncf %39 : vector<8x8xf32> to vector<8x8xbf16>
    %c0_17 = arith.constant 0 : index
    %c0_18 = arith.constant 0 : index
    %c0_19 = arith.constant 0 : index
    %41 = vector.load %arg7[%c0_17, %c0_18, %c0_19] : memref<1x8x32xbf16, #tpu.memory_space<vmem>>, vector<1x8x8xbf16>
    %42 = vector.shape_cast %41 : vector<1x8x8xbf16> to vector<8x8xbf16>
    %43 = vector.shape_cast %40 : vector<8x8xbf16> to vector<1x8x8xbf16>
    tpu.vector_store %arg7[%c0_17, %c0_18, %c0_19], %43 {strides = array<i32>} : memref<1x8x32xbf16, #tpu.memory_space<vmem>>, vector<1x8x8xbf16>,
    %44 = vector.extract_strided_slice %5 {offsets = [0, 8], sizes = [8, 8], strides = [1, 1]} : vector<8x32xbf16> to vector<8x8xbf16>
    %45 = vector.extract_strided_slice %7 {offsets = [0, 8], sizes = [8, 8], strides = [1, 1]} : vector<8x32xbf16> to vector<8x8xbf16>
    "tpu.trace_start"() <{level = 10 : i32, message = "qd,kd->qk"}> : () -> ()
    %cst_20 = arith.constant dense<0.000000e+00> : vector<8x8xf32>
    %46 = tpu.matmul %44, %45, %cst_20 {dimension_numbers = #tpu.dot_dimension_numbers<[1], [1], [0], [0], [0, 0, 1, 0], [], []>} : vector<8x8xbf16>, vector<8x8xbf16>, vector<8x8xf32> -> vector<8x8xf32>
    %cst_21 = arith.constant -1.000000e+30 : f32
    "tpu.trace_stop"() : () -> ()
    %47 = vector.broadcast %cst_21 : f32 to vector<8x8xf32>
    %48 = arith.select %21, %46, %47 : vector<8x8xi1>, vector<8x8xf32>
    %cst_22 = arith.constant dense<0xFF800000> : vector<8xf32>
    %49 = vector.multi_reduction <maximumf>, %48, %cst_22 [1] : vector<8x8xf32> to vector<8xf32>
    %50 = vector.shape_cast %49 : vector<8xf32> to vector<8x1xf32>
    %51 = vector.broadcast %50 : vector<8x1xf32> to vector<8x8xf32>
    %52 = arith.subf %48, %51 : vector<8x8xf32>
    %53 = math.exp %52 : vector<8x8xf32>
    %cst_23 = arith.constant dense<0.000000e+00> : vector<8xf32>
    %54 = vector.multi_reduction <add>, %53, %cst_23 [1] : vector<8x8xf32> to vector<8xf32>
    %55 = vector.shape_cast %54 : vector<8xf32> to vector<8x1xf32>
    %56 = tpu.reciprocal %55 {approx = true} : vector<8x1xf32> -> vector<8x1xf32>
    %57 = vector.broadcast %56 : vector<8x1xf32> to vector<8x8xf32>
    %58 = arith.mulf %53, %57 : vector<8x8xf32>
    %59 = arith.truncf %58 : vector<8x8xf32> to vector<8x8xbf16>
    %60 = vector.extract_strided_slice %9 {offsets = [0, 8], sizes = [8, 8], strides = [1, 1]} : vector<8x32xbf16> to vector<8x8xbf16>
    "tpu.trace_start"() <{level = 10 : i32, message = "qk,kd->qd"}> : () -> ()
    %cst_24 = arith.constant dense<0.000000e+00> : vector<8x8xf32>
    %61 = tpu.matmul %59, %60, %cst_24 {dimension_numbers = #tpu.dot_dimension_numbers<[1], [0], [0], [1], [0, 0, 1, 1], [], []>} : vector<8x8xbf16>, vector<8x8xbf16>, vector<8x8xf32> -> vector<8x8xf32>
    "tpu.trace_stop"() : () -> ()
    %62 = arith.truncf %61 : vector<8x8xf32> to vector<8x8xbf16>
    %c0_25 = arith.constant 0 : index
    %c0_26 = arith.constant 0 : index
    %c8 = arith.constant 8 : index
    %63 = vector.load %arg7[%c0_25, %c0_26, %c8] : memref<1x8x32xbf16, #tpu.memory_space<vmem>>, vector<1x8x8xbf16>
    %64 = vector.shape_cast %63 : vector<1x8x8xbf16> to vector<8x8xbf16>
    %65 = vector.shape_cast %62 : vector<8x8xbf16> to vector<1x8x8xbf16>
    tpu.vector_store %arg7[%c0_25, %c0_26, %c8], %65 {strides = array<i32>} : memref<1x8x32xbf16, #tpu.memory_space<vmem>>, vector<1x8x8xbf16>,
    %66 = vector.extract_strided_slice %5 {offsets = [0, 16], sizes = [8, 8], strides = [1, 1]} : vector<8x32xbf16> to vector<8x8xbf16>
    %67 = vector.extract_strided_slice %7 {offsets = [0, 16], sizes = [8, 8], strides = [1, 1]} : vector<8x32xbf16> to vector<8x8xbf16>
    "tpu.trace_start"() <{level = 10 : i32, message = "qd,kd->qk"}> : () -> ()
    %cst_27 = arith.constant dense<0.000000e+00> : vector<8x8xf32>
    %68 = tpu.matmul %66, %67, %cst_27 {dimension_numbers = #tpu.dot_dimension_numbers<[1], [1], [0], [0], [0, 0, 1, 0], [], []>} : vector<8x8xbf16>, vector<8x8xbf16>, vector<8x8xf32> -> vector<8x8xf32>
    %cst_28 = arith.constant -1.000000e+30 : f32
    "tpu.trace_stop"() : () -> ()
    %69 = vector.broadcast %cst_28 : f32 to vector<8x8xf32>
    %70 = arith.select %21, %68, %69 : vector<8x8xi1>, vector<8x8xf32>
    %cst_29 = arith.constant dense<0xFF800000> : vector<8xf32>
    %71 = vector.multi_reduction <maximumf>, %70, %cst_29 [1] : vector<8x8xf32> to vector<8xf32>
    %72 = vector.shape_cast %71 : vector<8xf32> to vector<8x1xf32>
    %73 = vector.broadcast %72 : vector<8x1xf32> to vector<8x8xf32>
    %74 = arith.subf %70, %73 : vector<8x8xf32>
    %75 = math.exp %74 : vector<8x8xf32>
    %cst_30 = arith.constant dense<0.000000e+00> : vector<8xf32>
    %76 = vector.multi_reduction <add>, %75, %cst_30 [1] : vector<8x8xf32> to vector<8xf32>
    %77 = vector.shape_cast %76 : vector<8xf32> to vector<8x1xf32>
    %78 = tpu.reciprocal %77 {approx = true} : vector<8x1xf32> -> vector<8x1xf32>
    %79 = vector.broadcast %78 : vector<8x1xf32> to vector<8x8xf32>
    %80 = arith.mulf %75, %79 : vector<8x8xf32>
    %81 = arith.truncf %80 : vector<8x8xf32> to vector<8x8xbf16>
    %82 = vector.extract_strided_slice %9 {offsets = [0, 16], sizes = [8, 8], strides = [1, 1]} : vector<8x32xbf16> to vector<8x8xbf16>
    "tpu.trace_start"() <{level = 10 : i32, message = "qk,kd->qd"}> : () -> ()
    %cst_31 = arith.constant dense<0.000000e+00> : vector<8x8xf32>
    %83 = tpu.matmul %81, %82, %cst_31 {dimension_numbers = #tpu.dot_dimension_numbers<[1], [0], [0], [1], [0, 0, 1, 1], [], []>} : vector<8x8xbf16>, vector<8x8xbf16>, vector<8x8xf32> -> vector<8x8xf32>
    "tpu.trace_stop"() : () -> ()
    %84 = arith.truncf %83 : vector<8x8xf32> to vector<8x8xbf16>
    %c0_32 = arith.constant 0 : index
    %c0_33 = arith.constant 0 : index
    %c16 = arith.constant 16 : index
    %85 = vector.load %arg7[%c0_32, %c0_33, %c16] : memref<1x8x32xbf16, #tpu.memory_space<vmem>>, vector<1x8x8xbf16>
    %86 = vector.shape_cast %85 : vector<1x8x8xbf16> to vector<8x8xbf16>
    %87 = vector.shape_cast %84 : vector<8x8xbf16> to vector<1x8x8xbf16>
    tpu.vector_store %arg7[%c0_32, %c0_33, %c16], %87 {strides = array<i32>} : memref<1x8x32xbf16, #tpu.memory_space<vmem>>, vector<1x8x8xbf16>,
    %88 = vector.extract_strided_slice %5 {offsets = [0, 24], sizes = [8, 8], strides = [1, 1]} : vector<8x32xbf16> to vector<8x8xbf16>
    %89 = vector.extract_strided_slice %7 {offsets = [0, 24], sizes = [8, 8], strides = [1, 1]} : vector<8x32xbf16> to vector<8x8xbf16>
    "tpu.trace_start"() <{level = 10 : i32, message = "qd,kd->qk"}> : () -> ()
    %cst_34 = arith.constant dense<0.000000e+00> : vector<8x8xf32>
    %90 = tpu.matmul %88, %89, %cst_34 {dimension_numbers = #tpu.dot_dimension_numbers<[1], [1], [0], [0], [0, 0, 1, 0], [], []>} : vector<8x8xbf16>, vector<8x8xbf16>, vector<8x8xf32> -> vector<8x8xf32>
    %cst_35 = arith.constant -1.000000e+30 : f32
    "tpu.trace_stop"() : () -> ()
    %91 = vector.broadcast %cst_35 : f32 to vector<8x8xf32>
    %92 = arith.select %21, %90, %91 : vector<8x8xi1>, vector<8x8xf32>
    %cst_36 = arith.constant dense<0xFF800000> : vector<8xf32>
    %93 = vector.multi_reduction <maximumf>, %92, %cst_36 [1] : vector<8x8xf32> to vector<8xf32>
    %94 = vector.shape_cast %93 : vector<8xf32> to vector<8x1xf32>
    %95 = vector.broadcast %94 : vector<8x1xf32> to vector<8x8xf32>
    %96 = arith.subf %92, %95 : vector<8x8xf32>
    %97 = math.exp %96 : vector<8x8xf32>
    %cst_37 = arith.constant dense<0.000000e+00> : vector<8xf32>
    %98 = vector.multi_reduction <add>, %97, %cst_37 [1] : vector<8x8xf32> to vector<8xf32>
    %99 = vector.shape_cast %98 : vector<8xf32> to vector<8x1xf32>
    %100 = tpu.reciprocal %99 {approx = true} : vector<8x1xf32> -> vector<8x1xf32>
    %101 = vector.broadcast %100 : vector<8x1xf32> to vector<8x8xf32>
    %102 = arith.mulf %97, %101 : vector<8x8xf32>
    %103 = arith.truncf %102 : vector<8x8xf32> to vector<8x8xbf16>
    %104 = vector.extract_strided_slice %9 {offsets = [0, 24], sizes = [8, 8], strides = [1, 1]} : vector<8x32xbf16> to vector<8x8xbf16>
    "tpu.trace_start"() <{level = 10 : i32, message = "qk,kd->qd"}> : () -> ()
    %cst_38 = arith.constant dense<0.000000e+00> : vector<8x8xf32>
    %105 = tpu.matmul %103, %104, %cst_38 {dimension_numbers = #tpu.dot_dimension_numbers<[1], [0], [0], [1], [0, 0, 1, 1], [], []>} : vector<8x8xbf16>, vector<8x8xbf16>, vector<8x8xf32> -> vector<8x8xf32>
    "tpu.trace_stop"() : () -> ()
    %106 = arith.truncf %105 : vector<8x8xf32> to vector<8x8xbf16>
    %c0_39 = arith.constant 0 : index
    %c0_40 = arith.constant 0 : index
    %c24 = arith.constant 24 : index
    %107 = vector.load %arg7[%c0_39, %c0_40, %c24] : memref<1x8x32xbf16, #tpu.memory_space<vmem>>, vector<1x8x8xbf16>
    %108 = vector.shape_cast %107 : vector<1x8x8xbf16> to vector<8x8xbf16>
    %109 = vector.shape_cast %106 : vector<8x8xbf16> to vector<1x8x8xbf16>
    tpu.vector_store %arg7[%c0_39, %c0_40, %c24], %109 {strides = array<i32>} : memref<1x8x32xbf16, #tpu.memory_space<vmem>>, vector<1x8x8xbf16>,
    return
  }
  func.func @transform_0(%arg0: i32, %arg1: i32, %arg2: i32) -> (i32, i32, i32) {
    %c0_i32 = arith.constant 0 : i32
    return %arg0, %arg2, %arg1 : i32, i32, i32
  }
  func.func @transform_1(%arg0: i32, %arg1: i32, %arg2: i32) -> (i32, i32, i32) {
    %c0_i32 = arith.constant 0 : i32
    %c0_i32_0 = arith.constant 0 : i32
    return %arg0, %c0_i32, %arg1 : i32, i32, i32
  }
  func.func @transform_2(%arg0: i32, %arg1: i32, %arg2: i32) -> (i32, i32, i32) {
    %c0_i32 = arith.constant 0 : i32
    %c0_i32_0 = arith.constant 0 : i32
    return %arg0, %c0_i32, %arg1 : i32, i32, i32
  }
  func.func @transform_3(%arg0: i32, %arg1: i32, %arg2: i32) -> (i32, i32, i32) {
    %c0_i32 = arith.constant 0 : i32
    %c0_i32_0 = arith.constant 0 : i32
    %c0_i32_1 = arith.constant 0 : i32
    return %arg0, %c0_i32, %c0_i32_0 : i32, i32, i32
  }
  func.func @transform_4(%arg0: i32, %arg1: i32, %arg2: i32) -> (i32, i32, i32) {
    %c0_i32 = arith.constant 0 : i32
    return %arg0, %arg2, %arg1 : i32, i32, i32
  }
}

module attributes {stable_mosaic.version = 11 : i64} {
  func.func @_attn_mlp_residual_kernel(%arg0: i32, %arg1: memref<16x32xbf16, #tpu.memory_space<vmem>>, %arg2: memref<16x32xbf16, #tpu.memory_space<vmem>>, %arg3: memref<32x32xbf16, #tpu.memory_space<vmem>>, %arg4: memref<1x32xf32, #tpu.memory_space<vmem>>, %arg5: memref<16x128xbf16, #tpu.memory_space<vmem>>, %arg6: memref<128x32xbf16, #tpu.memory_space<vmem>>, %arg7: memref<1x32xf32, #tpu.memory_space<vmem>>, %arg8: memref<16x32xbf16, #tpu.memory_space<vmem>>) attributes {dimension_semantics = [#tpu.dimension_semantics<parallel>], iteration_bounds = array<i64: 1>, scalar_prefetch = 0 : i64, scratch_operands = 0 : i64, tpu.core_type = #tpu.core_type<tc>, window_params = [{transform_indices = @transform_0, window_bounds = array<i64: 16, 32>}, {transform_indices = @transform_1, window_bounds = array<i64: 16, 32>}, {pipeline_mode = #tpu.pipeline_mode<synchronous>, transform_indices = @transform_2, window_bounds = array<i64: 32, 32>}, {pipeline_mode = #tpu.pipeline_mode<synchronous>, transform_indices = @transform_3, window_bounds = array<i64: 1, 32>}, {transform_indices = @transform_4, window_bounds = array<i64: 16, 128>}, {pipeline_mode = #tpu.pipeline_mode<synchronous>, transform_indices = @transform_5, window_bounds = array<i64: 128, 32>}, {pipeline_mode = #tpu.pipeline_mode<synchronous>, transform_indices = @transform_6, window_bounds = array<i64: 1, 32>}, {transform_indices = @transform_7, window_bounds = array<i64: 16, 32>}]} {
    %c0 = arith.constant 0 : index
    %c0_0 = arith.constant 0 : index
    %0 = vector.load %arg2[%c0, %c0_0] : memref<16x32xbf16, #tpu.memory_space<vmem>>, vector<16x32xbf16>
    %c0_1 = arith.constant 0 : index
    %c0_2 = arith.constant 0 : index
    %1 = vector.load %arg3[%c0_1, %c0_2] : memref<32x32xbf16, #tpu.memory_space<vmem>>, vector<32x32xbf16>
    %cst = arith.constant dense<0.000000e+00> : vector<16x32xf32>
    %2 = tpu.matmul %0, %1, %cst {dimension_numbers = #tpu.dot_dimension_numbers<[1], [0], [0], [1], [0, 0, 1, 1], [], []>} : vector<16x32xbf16>, vector<32x32xbf16>, vector<16x32xf32> -> vector<16x32xf32>
    %c0_3 = arith.constant 0 : index
    %c0_4 = arith.constant 0 : index
    %3 = vector.load %arg4[%c0_3, %c0_4] : memref<1x32xf32, #tpu.memory_space<vmem>>, vector<1x32xf32>
    %4 = vector.broadcast %3 : vector<1x32xf32> to vector<16x32xf32>
    %5 = arith.addf %2, %4 : vector<16x32xf32>
    %c0_5 = arith.constant 0 : index
    %c0_6 = arith.constant 0 : index
    %6 = vector.load %arg5[%c0_5, %c0_6] : memref<16x128xbf16, #tpu.memory_space<vmem>>, vector<16x128xbf16>
    %7 = arith.extf %6 : vector<16x128xbf16> to vector<16x128xf32>
    %8 = arith.mulf %7, %7 : vector<16x128xf32>
    %9 = arith.mulf %7, %8 : vector<16x128xf32>
    %cst_7 = arith.constant 4.471500e-02 : f32
    %10 = vector.broadcast %cst_7 : f32 to vector<16x128xf32>
    %11 = arith.mulf %10, %9 : vector<16x128xf32>
    %12 = arith.addf %7, %11 : vector<16x128xf32>
    %cst_8 = arith.constant 0.797884583 : f32
    %13 = vector.broadcast %cst_8 : f32 to vector<16x128xf32>
    %14 = arith.mulf %13, %12 : vector<16x128xf32>
    %15 = math.tanh %14 : vector<16x128xf32>
    %cst_9 = arith.constant 1.000000e+00 : f32
    %16 = vector.broadcast %cst_9 : f32 to vector<16x128xf32>
    %17 = arith.addf %16, %15 : vector<16x128xf32>
    %cst_10 = arith.constant 5.000000e-01 : f32
    %18 = vector.broadcast %cst_10 : f32 to vector<16x128xf32>
    %19 = arith.mulf %18, %17 : vector<16x128xf32>
    %20 = arith.mulf %7, %19 : vector<16x128xf32>
    %21 = arith.truncf %20 : vector<16x128xf32> to vector<16x128xbf16>
    %c0_11 = arith.constant 0 : index
    %c0_12 = arith.constant 0 : index
    %22 = vector.load %arg6[%c0_11, %c0_12] : memref<128x32xbf16, #tpu.memory_space<vmem>>, vector<128x32xbf16>
    %cst_13 = arith.constant dense<0.000000e+00> : vector<16x32xf32>
    %23 = tpu.matmul %21, %22, %cst_13 {dimension_numbers = #tpu.dot_dimension_numbers<[1], [0], [0], [1], [0, 0, 1, 1], [], []>} : vector<16x128xbf16>, vector<128x32xbf16>, vector<16x32xf32> -> vector<16x32xf32>
    %24 = arith.addf %5, %23 : vector<16x32xf32>
    %c0_14 = arith.constant 0 : index
    %c0_15 = arith.constant 0 : index
    %25 = vector.load %arg7[%c0_14, %c0_15] : memref<1x32xf32, #tpu.memory_space<vmem>>, vector<1x32xf32>
    %26 = vector.broadcast %25 : vector<1x32xf32> to vector<16x32xf32>
    %27 = arith.addf %24, %26 : vector<16x32xf32>
    %c0_16 = arith.constant 0 : index
    %c0_17 = arith.constant 0 : index
    %28 = vector.load %arg1[%c0_16, %c0_17] : memref<16x32xbf16, #tpu.memory_space<vmem>>, vector<16x32xbf16>
    %29 = arith.extf %28 : vector<16x32xbf16> to vector<16x32xf32>
    %30 = arith.addf %29, %27 : vector<16x32xf32>
    %31 = arith.truncf %30 : vector<16x32xf32> to vector<16x32xbf16>
    %c0_18 = arith.constant 0 : index
    %c0_19 = arith.constant 0 : index
    %32 = vector.load %arg8[%c0_18, %c0_19] : memref<16x32xbf16, #tpu.memory_space<vmem>>, vector<16x32xbf16>
    tpu.vector_store %arg8[%c0_18, %c0_19], %31 {strides = array<i32>} : memref<16x32xbf16, #tpu.memory_space<vmem>>, vector<16x32xbf16>,
    return
  }
  func.func @transform_0(%arg0: i32) -> (i32, i32) {
    %c0_i32 = arith.constant 0 : i32
    %c0_i32_0 = arith.constant 0 : i32
    return %arg0, %c0_i32 : i32, i32
  }
  func.func @transform_1(%arg0: i32) -> (i32, i32) {
    %c0_i32 = arith.constant 0 : i32
    %c0_i32_0 = arith.constant 0 : i32
    return %arg0, %c0_i32 : i32, i32
  }
  func.func @transform_2(%arg0: i32) -> (i32, i32) {
    %c0_i32 = arith.constant 0 : i32
    %c0_i32_0 = arith.constant 0 : i32
    %c0_i32_1 = arith.constant 0 : i32
    return %c0_i32, %c0_i32_0 : i32, i32
  }
  func.func @transform_3(%arg0: i32) -> (i32, i32) {
    %c0_i32 = arith.constant 0 : i32
    %c0_i32_0 = arith.constant 0 : i32
    %c0_i32_1 = arith.constant 0 : i32
    return %c0_i32, %c0_i32_0 : i32, i32
  }
  func.func @transform_4(%arg0: i32) -> (i32, i32) {
    %c0_i32 = arith.constant 0 : i32
    %c0_i32_0 = arith.constant 0 : i32
    return %arg0, %c0_i32 : i32, i32
  }
  func.func @transform_5(%arg0: i32) -> (i32, i32) {
    %c0_i32 = arith.constant 0 : i32
    %c0_i32_0 = arith.constant 0 : i32
    %c0_i32_1 = arith.constant 0 : i32
    return %c0_i32, %c0_i32_0 : i32, i32
  }
  func.func @transform_6(%arg0: i32) -> (i32, i32) {
    %c0_i32 = arith.constant 0 : i32
    %c0_i32_0 = arith.constant 0 : i32
    %c0_i32_1 = arith.constant 0 : i32
    return %c0_i32, %c0_i32_0 : i32, i32
  }
  func.func @transform_7(%arg0: i32) -> (i32, i32) {
    %c0_i32 = arith.constant 0 : i32
    %c0_i32_0 = arith.constant 0 : i32
    return %arg0, %c0_i32 : i32, i32
  }
}

module attributes {stable_mosaic.version = 11 : i64} {
  func.func @_lnf_meanpool_kernel(%arg0: i32, %arg1: i32, %arg2: memref<1x8x32xbf16, #tpu.memory_space<vmem>>, %arg3: memref<1x32xf32, #tpu.memory_space<vmem>>, %arg4: memref<1x32xf32, #tpu.memory_space<vmem>>, %arg5: memref<1x1x32xf32, #tpu.memory_space<vmem>>, %arg6: memref<1x32xf32, #tpu.memory_space<vmem>>) attributes {dimension_semantics = [#tpu.dimension_semantics<parallel>, #tpu.dimension_semantics<arbitrary>], iteration_bounds = array<i64: 2, 1>, scalar_prefetch = 0 : i64, scratch_operands = 1 : i64, tpu.core_type = #tpu.core_type<tc>, window_params = [{transform_indices = @transform_0, window_bounds = array<i64: 1, 8, 32>}, {pipeline_mode = #tpu.pipeline_mode<synchronous>, transform_indices = @transform_1, window_bounds = array<i64: 1, 32>}, {pipeline_mode = #tpu.pipeline_mode<synchronous>, transform_indices = @transform_2, window_bounds = array<i64: 1, 32>}, {transform_indices = @transform_3, window_bounds = array<i64: 1, 1, 32>}]} {
    %c0_i32 = arith.constant 0 : i32
    %0 = arith.cmpi eq, %arg1, %c0_i32 : i32
    %1 = arith.extui %0 : i1 to i32
    %c0_i32_0 = arith.constant 0 : i32
    %2 = arith.cmpi ne, %1, %c0_i32_0 : i32
    scf.if %2 {
      %cst_18 = arith.constant 0.000000e+00 : f32
      %38 = vector.broadcast %cst_18 : f32 to vector<1x32xf32>
      %c0_19 = arith.constant 0 : index
      %c0_20 = arith.constant 0 : index
      %39 = vector.load %arg6[%c0_19, %c0_20] : memref<1x32xf32, #tpu.memory_space<vmem>>, vector<1x32xf32>
      tpu.vector_store %arg6[%c0_19, %c0_20], %38 {strides = array<i32>} : memref<1x32xf32, #tpu.memory_space<vmem>>, vector<1x32xf32>,
    } else {
    }
    %c0 = arith.constant 0 : index
    %c0_1 = arith.constant 0 : index
    %c0_2 = arith.constant 0 : index
    %3 = vector.load %arg2[%c0, %c0_1, %c0_2] : memref<1x8x32xbf16, #tpu.memory_space<vmem>>, vector<1x8x32xbf16>
    %4 = vector.shape_cast %3 : vector<1x8x32xbf16> to vector<8x32xbf16>
    %5 = arith.extf %4 : vector<8x32xbf16> to vector<8x32xf32>
    %cst = arith.constant dense<0.000000e+00> : vector<8xf32>
    %6 = vector.multi_reduction <add>, %5, %cst [1] : vector<8x32xf32> to vector<8xf32>
    %7 = vector.shape_cast %6 : vector<8xf32> to vector<8x1xf32>
    %cst_3 = arith.constant 3.200000e+01 : f32
    %8 = vector.broadcast %cst_3 : f32 to vector<8x1xf32>
    %9 = arith.divf %7, %8 : vector<8x1xf32>
    %10 = vector.broadcast %9 : vector<8x1xf32> to vector<8x32xf32>
    %11 = arith.subf %5, %10 : vector<8x32xf32>
    %12 = arith.mulf %11, %11 : vector<8x32xf32>
    %cst_4 = arith.constant dense<0.000000e+00> : vector<8xf32>
    %13 = vector.multi_reduction <add>, %12, %cst_4 [1] : vector<8x32xf32> to vector<8xf32>
    %14 = vector.shape_cast %13 : vector<8xf32> to vector<8x1xf32>
    %cst_5 = arith.constant 3.200000e+01 : f32
    %15 = vector.broadcast %cst_5 : f32 to vector<8x1xf32>
    %16 = arith.divf %14, %15 : vector<8x1xf32>
    %17 = vector.broadcast %9 : vector<8x1xf32> to vector<8x32xf32>
    %18 = arith.subf %5, %17 : vector<8x32xf32>
    %cst_6 = arith.constant 9.99999974E-6 : f32
    %19 = vector.broadcast %cst_6 : f32 to vector<8x1xf32>
    %20 = arith.addf %16, %19 : vector<8x1xf32>
    %21 = math.rsqrt %20 : vector<8x1xf32>
    %22 = vector.broadcast %21 : vector<8x1xf32> to vector<8x32xf32>
    %23 = arith.mulf %18, %22 : vector<8x32xf32>
    %c0_7 = arith.constant 0 : index
    %c0_8 = arith.constant 0 : index
    %24 = vector.load %arg3[%c0_7, %c0_8] : memref<1x32xf32, #tpu.memory_space<vmem>>, vector<1x32xf32>
    %25 = vector.broadcast %24 : vector<1x32xf32> to vector<8x32xf32>
    %26 = arith.mulf %23, %25 : vector<8x32xf32>
    %c0_9 = arith.constant 0 : index
    %c0_10 = arith.constant 0 : index
    %27 = vector.load %arg4[%c0_9, %c0_10] : memref<1x32xf32, #tpu.memory_space<vmem>>, vector<1x32xf32>
    %28 = vector.broadcast %27 : vector<1x32xf32> to vector<8x32xf32>
    %29 = arith.addf %26, %28 : vector<8x32xf32>
    %c0_11 = arith.constant 0 : index
    %c0_12 = arith.constant 0 : index
    %30 = vector.load %arg6[%c0_11, %c0_12] : memref<1x32xf32, #tpu.memory_space<vmem>>, vector<1x32xf32>
    %cst_13 = arith.constant dense<0.000000e+00> : vector<32xf32>
    %31 = vector.multi_reduction <add>, %29, %cst_13 [0] : vector<8x32xf32> to vector<32xf32>
    %32 = vector.shape_cast %31 : vector<32xf32> to vector<1x32xf32>
    %33 = arith.addf %30, %32 : vector<1x32xf32>
    %c0_14 = arith.constant 0 : index
    %c0_15 = arith.constant 0 : index
    %34 = vector.load %arg6[%c0_14, %c0_15] : memref<1x32xf32, #tpu.memory_space<vmem>>, vector<1x32xf32>
    tpu.vector_store %arg6[%c0_14, %c0_15], %33 {strides = array<i32>} : memref<1x32xf32, #tpu.memory_space<vmem>>, vector<1x32xf32>,
    %c0_i32_16 = arith.constant 0 : i32
    %35 = arith.cmpi eq, %arg1, %c0_i32_16 : i32
    %36 = arith.extui %35 : i1 to i32
    %c0_i32_17 = arith.constant 0 : i32
    %37 = arith.cmpi ne, %36, %c0_i32_17 : i32
    scf.if %37 {
      %c0_18 = arith.constant 0 : index
      %c0_19 = arith.constant 0 : index
      %38 = vector.load %arg6[%c0_18, %c0_19] : memref<1x32xf32, #tpu.memory_space<vmem>>, vector<1x32xf32>
      %cst_20 = arith.constant 1.250000e-01 : f32
      %39 = vector.broadcast %cst_20 : f32 to vector<1x32xf32>
      %40 = arith.mulf %38, %39 : vector<1x32xf32>
      %c0_21 = arith.constant 0 : index
      %c0_22 = arith.constant 0 : index
      %c0_23 = arith.constant 0 : index
      %41 = vector.load %arg5[%c0_21, %c0_22, %c0_23] : memref<1x1x32xf32, #tpu.memory_space<vmem>>, vector<1x1x32xf32>
      %42 = vector.shape_cast %41 : vector<1x1x32xf32> to vector<1x32xf32>
      %43 = vector.shape_cast %40 : vector<1x32xf32> to vector<1x1x32xf32>
      tpu.vector_store %arg5[%c0_21, %c0_22, %c0_23], %43 {strides = array<i32>} : memref<1x1x32xf32, #tpu.memory_space<vmem>>, vector<1x1x32xf32>,
    } else {
    }
    return
  }
  func.func @transform_0(%arg0: i32, %arg1: i32) -> (i32, i32, i32) {
    %c0_i32 = arith.constant 0 : i32
    %c0_i32_0 = arith.constant 0 : i32
    return %arg0, %arg1, %c0_i32 : i32, i32, i32
  }
  func.func @transform_1(%arg0: i32, %arg1: i32) -> (i32, i32) {
    %c0_i32 = arith.constant 0 : i32
    %c0_i32_0 = arith.constant 0 : i32
    %c0_i32_1 = arith.constant 0 : i32
    return %c0_i32, %c0_i32_0 : i32, i32
  }
  func.func @transform_2(%arg0: i32, %arg1: i32) -> (i32, i32) {
    %c0_i32 = arith.constant 0 : i32
    %c0_i32_0 = arith.constant 0 : i32
    %c0_i32_1 = arith.constant 0 : i32
    return %c0_i32, %c0_i32_0 : i32, i32
  }
  func.func @transform_3(%arg0: i32, %arg1: i32) -> (i32, i32, i32) {
    %c0_i32 = arith.constant 0 : i32
    %c0_i32_0 = arith.constant 0 : i32
    %c0_i32_1 = arith.constant 0 : i32
    return %arg0, %c0_i32, %c0_i32_0 : i32, i32, i32
  }
}

</mosaic_0001>

<llo_original>
// kernel: encoder_forward.13
$region0: #{encoder_forward.13}
  #allocation0 [shape = 'u32[]', space=smem, size = 0x4, offset = 0x4, fixed_abs, tag = 'smem constant byte address 0x4 - core index']
  #allocation1 [shape = 'u32[144,128]{1,0:T(1,128)}', space=vmem, size = 0x12000, scoped, tag = 'internal scratch']
  #allocation2 [shape = 'f32[1,32]{1,0:T(1,128)}', space=vmem, size = 0x200, scoped, tag = 'scratch operand']
  %s0 = inlined_call_operand.vmem [shape: bf16[2,8,32], index: 0, kind: input, shape index: {}]
  %s1 = inlined_call_operand.vmem [shape: f32[1,32], index: 1, kind: input, shape index: {}]
  %s2 = inlined_call_operand.vmem [shape: f32[1,32], index: 2, kind: input, shape index: {}]
  %s3 = inlined_call_operand.hbm [shape: f32[2,1,32], index: 3, kind: output, shape index: {}]
  %s4 = sld [smem:[#allocation0]]
  $region53: #{encoder_forward.13} parent=0
    _
  %s6 = ssub.s32 1, %s4
  %s7 = scalar_select 0, %s6, %s4
  $region1: #{encoder_forward.13} parent=0
    #allocation3 [shape = 'u8[1024]{0}', space=vmem, size = 0x400, scoped, tag = 'output window, operand 0']
    #allocation4 [shape = 's32[2]{0}', space=sflag, size = 0x8, scoped, tag = 'scoped memory for encoder_forward.13']
    %8 = vsyncpa [#allocation4], 0
    %s9 = scalar_lea.sflag [#allocation4], 1
    %10 = vsyncpa %s9, 0
    loop: start=0, step=1, limit=4
    $region2: #{encoder_forward.13} parent=1 // loop_pre_header
      _
    $region3: #{encoder_forward.13} parent=1 // loop_header
      %s12 = sphi 0, %s16
      %p13 = scmp.ge.s32.totalorder %s12, 4
      %s19 = sphi 0, %s31
      %s20 = sphi 0, %s27
      %s21 = sphi 0, %s19
      %s22 = sphi 0, %s20
      %s23 = sphi 0, %s21
      %s24 = sphi 0, %s22
      %s36 = sphi 0, %s38
      %s39 = sphi 0, %s36
      %s40 = sphi 0, %s39
      %s56 = sphi 0, %s40
      %s60 = sphi 0, %s60
      %s62 = sphi 0, %s60
      %s63 = sphi 0, %s62
      %s77 = sphi 0, %s63
      %s81 = sphi 0, %s81
      %s83 = sphi 0, %s81
      %s84 = sphi 0, %s83
      %s98 = sphi 0, %s84
      %s104 = sphi 0, %s106
      %s107 = sphi 0, %s104
      %s108 = sphi 0, %s107
      %s124 = sphi 0, %s108
    $region4: #{encoder_forward.13} parent=1 // loop_header_branch
      %15 = sbr.rel (%p13) target = $region8
    $region5: #{encoder_forward.13} parent=1 // loop_body
      %s17 = ssub.s32 %s12, 1
      %s18 = ssub.s32 %s12, 2
      %s25 = sadd.s32 1, %s20
      %p26 = scmp.ge.s32.totalorder %s25, 1
      %s27 = scalar_select %p26, 0, %s25
      %s28 = sadd.s32 1, %s19
      %s29 = scalar_select %p26, %s28, %s19
      %p30 = scmp.ge.s32.totalorder %s29, 2
      %s31 = scalar_select %p30, 0, %s29
      %s32 = ssub.s32 %s19, %s31
      %s33 = ssub.s32 %s20, %s27
      %s34 = sor.u32 %s32, %s33
      %p35 = scmp.eq.s32.totalorder %s34, 0
      %s37 = sadd.s32 %s36, 1
      %s38 = scalar_select %p35, %s36, %s37
      %p41 = pneg %p35
      %p42 = scmp.eq.s32.totalorder %s12, 1
      %p43 = por %p41, %p42
      %p44 = scmp.ne.s32.totalorder %s36, %s39
      %p45 = scmp.eq.s32.totalorder %s12, 0
      %p46 = por %p44, %p45
      %p47 = scmp.ne.s32.totalorder %s36, %s39
      %p48 = scmp.eq.s32.totalorder %s17, 1
      %p49 = por %p47, %p48
      %p50 = scmp.ne.s32.totalorder %s39, %s40
      %p51 = scmp.eq.s32.totalorder %s17, 0
      %p52 = por %p50, %p51
      %p53 = scmp.ne.s32.totalorder %s39, %s40
      %p54 = scmp.eq.s32.totalorder %s18, 1
      %p55 = por %p53, %p54
      %p57 = scmp.ne.s32.totalorder %s40, %s56
      %p58 = scmp.eq.s32.totalorder %s18, 0
      %p59 = por %p57, %p58
      %s61 = sadd.s32 %s60, 1
      %p64 = scmp.eq.s32.totalorder %s12, 1
      %p65 = scmp.ne.s32.totalorder %s60, %s62
      %p66 = scmp.eq.s32.totalorder %s12, 0
      %p67 = por %p65, %p66
      %p68 = scmp.ne.s32.totalorder %s60, %s62
      %p69 = scmp.eq.s32.totalorder %s17, 1
      %p70 = por %p68, %p69
      %p71 = scmp.ne.s32.totalorder %s62, %s63
      %p72 = scmp.eq.s32.totalorder %s17, 0
      %p73 = por %p71, %p72
      %p74 = scmp.ne.s32.totalorder %s62, %s63
      %p75 = scmp.eq.s32.totalorder %s18, 1
      %p76 = por %p74, %p75
      %p78 = scmp.ne.s32.totalorder %s63, %s77
      %p79 = scmp.eq.s32.totalorder %s18, 0
      %p80 = por %p78, %p79
      %s82 = sadd.s32 %s81, 1
      %p85 = scmp.eq.s32.totalorder %s12, 1
      %p86 = scmp.ne.s32.totalorder %s81, %s83
      %p87 = scmp.eq.s32.totalorder %s12, 0
      %p88 = por %p86, %p87
      %p89 = scmp.ne.s32.totalorder %s81, %s83
      %p90 = scmp.eq.s32.totalorder %s17, 1
      %p91 = por %p89, %p90
      %p92 = scmp.ne.s32.totalorder %s83, %s84
      %p93 = scmp.eq.s32.totalorder %s17, 0
      %p94 = por %p92, %p93
      %p95 = scmp.ne.s32.totalorder %s83, %s84
      %p96 = scmp.eq.s32.totalorder %s18, 1
      %p97 = por %p95, %p96
      %p99 = scmp.ne.s32.totalorder %s84, %s98
      %p100 = scmp.eq.s32.totalorder %s18, 0
      %p101 = por %p99, %p100
      %s102 = ssub.s32 %s19, %s31
      %p103 = scmp.eq.s32.totalorder %s102, 0
      %s105 = sadd.s32 %s104, 1
      %s106 = scalar_select %p103, %s104, %s105
      %p109 = pneg %p103
      %p110 = scmp.eq.s32.totalorder %s12, 1
      %p111 = por %p109, %p110
      %p112 = scmp.ne.s32.totalorder %s104, %s107
      %p113 = scmp.eq.s32.totalorder %s12, 0
      %p114 = por %p112, %p113
      %p115 = scmp.ne.s32.totalorder %s104, %s107
      %p116 = scmp.eq.s32.totalorder %s17, 1
      %p117 = por %p115, %p116
      %p118 = scmp.ne.s32.totalorder %s107, %s108
      %p119 = scmp.eq.s32.totalorder %s17, 0
      %p120 = por %p118, %p119
      %p121 = scmp.ne.s32.totalorder %s107, %s108
      %p122 = scmp.eq.s32.totalorder %s18, 1
      %p123 = por %p121, %p122
      %p125 = scmp.ne.s32.totalorder %s108, %s124
      %p126 = scmp.eq.s32.totalorder %s18, 0
      %p127 = por %p125, %p126
      %p128 = scmp.le.s32.totalorder 1, %s12
      %p129 = scmp.lt.s32.totalorder %s12, 3
      %p130 = pnand %p128, %p129
      %p131 = pneg %p130
      // Predicated region
      $region9: #{encoder_forward.13} parent=5 // pred_check
        _
      $region10: #{encoder_forward.13} parent=5 // pred_check_branch
        %133 = sbr.rel (%p130) target = $region12
      $region11: #{encoder_forward.13} parent=5 // pred_region
        %s134 = ssub.s32 %s12, 1
        // Predicated region
        $region13: #{encoder_forward.13} parent=11 // pred_check
          %p135 = pneg %p73
        $region14: #{encoder_forward.13} parent=11 // pred_check_branch
          %137 = sbr.rel (%p135) target = $region16
        $region15: #{encoder_forward.13} parent=11 // pred_region
          _
        $region16: #{encoder_forward.13} parent=11 // pred_fallthru
          _
        // Predicated region
        $region17: #{encoder_forward.13} parent=11 // pred_check
          %p138 = pneg %p94
        $region18: #{encoder_forward.13} parent=11 // pred_check_branch
          %140 = sbr.rel (%p138) target = $region20
        $region19: #{encoder_forward.13} parent=11 // pred_region
          _
        $region20: #{encoder_forward.13} parent=11 // pred_fallthru
          _
      $region12: #{encoder_forward.13} parent=5 // pred_fallthru
        _
      %p141 = scmp.lt.s32.totalorder %s12, 2
      // Predicated region
      $region21: #{encoder_forward.13} parent=5 // pred_check
        %p142 = pneg %p141
      $region22: #{encoder_forward.13} parent=5 // pred_check_branch
        %144 = sbr.rel (%p142) target = $region24
      $region23: #{encoder_forward.13} parent=5 // pred_region
        // Predicated region
        $region25: #{encoder_forward.13} parent=23 // pred_check
          %p145 = pneg %p46
        $region26: #{encoder_forward.13} parent=23 // pred_check_branch
          %147 = sbr.rel (%p145) target = $region28
        $region27: #{encoder_forward.13} parent=23 // pred_region
          %p148 = scmp.lt.s32.totalorder %s19, 1
          %s149 = scalar_select %p148, %s19, 1
          %p150 = scmp.lt.s32.totalorder %s20, 0
          %s151 = scalar_select %p150, %s20, 0
          %s152 = sadd.s32 %s151, %s149
          %s153 = smul.addr %s152, 4
          %s154 = scalar_lea.vmem %s0, %s153
        $region28: #{encoder_forward.13} parent=23 // pred_fallthru
          _
      $region24: #{encoder_forward.13} parent=5 // pred_fallthru
        _
      %p155 = scmp.le.s32.totalorder 1, %s12
      %p156 = scmp.lt.s32.totalorder %s12, 3
      %p157 = pnand %p155, %p156
      %p158 = pneg %p157
      // Predicated region
      $region29: #{encoder_forward.13} parent=5 // pred_check
        _
      $region30: #{encoder_forward.13} parent=5 // pred_check_branch
        %160 = sbr.rel (%p157) target = $region32
      $region31: #{encoder_forward.13} parent=5 // pred_region
        %s161 = ssub.s32 %s12, 1
        %p162 = scmp.lt.s32.totalorder %s21, 1
        %s163 = scalar_select %p162, %s21, 1
        %p164 = scmp.lt.s32.totalorder %s22, 0
        %s165 = scalar_select %p164, %s22, 0
        %s166 = sadd.s32 %s165, %s163
        %s167 = smul.addr %s166, 4
        %s168 = scalar_lea.vmem %s0, %s167
        %p169 = pneg %p52
        %p170 = pneg %p49
        %p171 = pneg %p73
        %p172 = pneg %p70
        %p173 = pneg %p94
        %p174 = pneg %p91
        %p175 = pneg %p120
        %p176 = pneg %p117
        %s177 = sand.u32 %s107, 1
        %s178 = scalar_lea.sflag [#allocation4], %s177
        %s179 = sand.u32 %s107, 1
        %s180 = scalar_lea.vmem [#allocation3], %s179
        %p181 = scmp.lt.s32.totalorder %s21, 1
        %s182 = scalar_select %p181, %s21, 1
        %p183 = scmp.lt.s32.totalorder %s22, 0
        %s184 = scalar_select %p183, %s22, 0
        %s185 = sadd.s32 %s184, %s182
        %s186 = smul.addr %s185, 4
        %s187 = scalar_lea.vmem %s0, %s186
        %p188 = scmp.eq.s32.totalorder %s22, 0
        // Predicated region
        $region33: #{encoder_forward.13} parent=31 // pred_check
          %p189 = pneg %p188
        $region34: #{encoder_forward.13} parent=31 // pred_check_branch
          %191 = sbr.rel (%p189) target = $region36
        $region35: #{encoder_forward.13} parent=31 // pred_region
          %vm192 = vcmask 253952
          %193 = vst.msk [vmem:[#allocation2] sm:$0x1] %vm192, 0.0
        $region36: #{encoder_forward.13} parent=31 // pred_fallthru
          _
        %v194 = vld [vmem:[%s187] sm:$0xf]
        %v195 = vunpack.c.l.bf16 %v194
        %vm196 = vcmask 261120
        %v197 = vsel %vm196, %v195, 0.0
        %198 = vadd.xlane.f32.xlu0 %v197
        %v199 = vpop.xlane.xlu0 %198
        %v200 = vrcp.pop 32.0
        %v201 = vmul.f32 %v199, %v200
        %v202 = vsub.f32 %v195, %v201
        %v203 = vmul.f32 %v202, %v202
        %v204 = vsel %vm196, %v203, 0.0
        %205 = vadd.xlane.f32.xlu0 %v204
        %v206 = vpop.xlane.xlu0 %205
        %v207 = vmul.f32 %v206, %v200
        %v208 = vadd.f32 %v207, 1e-05
        %v209 = vrsqrt.pop %v208
        %v210 = vmul.f32 %v202, %v209
        %v211 = vld [vmem:[%s1] sm:$0x1]
        %v213 = vlaneseq
        %v214 = vshrl.u32 %v213, 7
        %v215 = vsub.s32 0, %v214
        %v216 = vrot.slane %v211, %v215
        %v218 = vmul.f32 %v210, %v216
        %v219 = vld [vmem:[%s2] sm:$0x1]
        %v221 = vlaneseq
        %v222 = vshrl.u32 %v221, 7
        %v223 = vsub.s32 0, %v222
        %v224 = vrot.slane %v219, %v223
        %v226 = vadd.f32 %v218, %v224
        %v227 = vld [vmem:[#allocation2] sm:$0x1]
        %v228 = vsel %vm196, %v226, 0.0
        %v229 = vrot.slane %v228, 4
        %v230 = vadd.f32 %v228, %v229
        %v231 = vrot.slane %v230, 2
        %v232 = vadd.f32 %v230, %v231
        %v233 = vrot.slane %v232, 1
        %v234 = vadd.f32 %v232, %v233
        %v235 = vadd.f32 %v227, %v234
        %vm236 = vcmask 253952
        %237 = vst.msk [vmem:[#allocation2] sm:$0x1] %vm236, %v235
        // Predicated region
        $region37: #{encoder_forward.13} parent=31 // pred_check
          %p238 = pneg %p188
        $region38: #{encoder_forward.13} parent=31 // pred_check_branch
          %240 = sbr.rel (%p238) target = $region40
        $region39: #{encoder_forward.13} parent=31 // pred_region
          %v241 = vld [vmem:[#allocation2] sm:$0x1]
          %v242 = vmul.f32 %v241, 0.125
          %243 = vst.msk [vmem:[%s180] sm:$0x1] %vm236, %v242
        $region40: #{encoder_forward.13} parent=31 // pred_fallthru
          _
        %s244 = sand.u32 %s107, 1
        %s245 = scalar_lea.sflag [#allocation4], %s244
        %s246 = sand.u32 %s107, 1
        %s247 = scalar_lea.vmem [#allocation3], %s246
        // Predicated region
        $region41: #{encoder_forward.13} parent=31 // pred_check
          %p248 = pneg %p117
        $region42: #{encoder_forward.13} parent=31 // pred_check_branch
          %250 = sbr.rel (%p248) target = $region44
        $region43: #{encoder_forward.13} parent=31 // pred_region
          %s252 = ssub.s32 16, 16
          %253 = vsyncadd %s245, %s252
          %s254 = smul.addr %s21, 16
          %s255 = scalar_lea.hbm %s3, %s254
          %s257 = sshll.u32 %s247, 4
          %s258 = int_to_ptr.vmem [resolvable:$true] %s257
          %260 = dma.vmem_to_hbm [thread:$0]  %s258, 16, %s255, %s245
        $region44: #{encoder_forward.13} parent=31 // pred_fallthru
          _
      $region32: #{encoder_forward.13} parent=5 // pred_fallthru
        _
      %p261 = scmp.le.s32.totalorder 2, %s12
      // Predicated region
      $region45: #{encoder_forward.13} parent=5 // pred_check
        %p262 = pneg %p261
      $region46: #{encoder_forward.13} parent=5 // pred_check_branch
        %264 = sbr.rel (%p262) target = $region48
      $region47: #{encoder_forward.13} parent=5 // pred_region
        %s265 = ssub.s32 %s12, 2
        // Predicated region
        $region49: #{encoder_forward.13} parent=47 // pred_check
          %p266 = pneg %p123
        $region50: #{encoder_forward.13} parent=47 // pred_check_branch
          %268 = sbr.rel (%p266) target = $region52
        $region51: #{encoder_forward.13} parent=47 // pred_region
          %s269 = sand.u32 %s108, 1
          %s270 = scalar_lea.sflag [#allocation4], %s269
          %s271 = sand.u32 %s108, 1
          %s272 = scalar_lea.vmem [#allocation3], %s271
          %273 = dma.done %s270, 16
        $region52: #{encoder_forward.13} parent=47 // pred_fallthru
          _
      $region48: #{encoder_forward.13} parent=5 // pred_fallthru
        _
    $region6: #{encoder_forward.13} parent=1 // loop_footer
      %s16 = sadd.s32 1, %s12
    $region7: #{encoder_forward.13} parent=1 // loop_footer_branch
      %11 = sbr.rel target = $region3
    $region8: #{encoder_forward.13} parent=1 // loop_exit
      _
    %274 = vsyncpa [#allocation4], 1
    %s275 = scalar_lea.sflag [#allocation4], 1
    %276 = vsyncpa %s275, 1

// kernel: encoder_forward.7
$region0: #{encoder_forward.7}
  #allocation0 [shape = 'u32[]', space=smem, size = 0x4, offset = 0x4, fixed_abs, tag = 'smem constant byte address 0x4 - core index']
  #allocation1 [shape = 'u32[144,128]{1,0:T(1,128)}', space=vmem, size = 0x12000, scoped, tag = 'internal scratch']
  %s0 = inlined_call_operand.vmem [shape: bf16[16,32], index: 0, kind: input, shape index: {}]
  %s1 = inlined_call_operand.vmem [shape: f32[1,32], index: 1, kind: input, shape index: {}]
  %s2 = inlined_call_operand.vmem [shape: f32[1,32], index: 2, kind: input, shape index: {}]
  %s3 = inlined_call_operand.vmem [shape: bf16[32,96], index: 3, kind: input, shape index: {}]
  %s4 = inlined_call_operand.vmem [shape: f32[1,96], index: 4, kind: input, shape index: {}]
  %s5 = inlined_call_operand.vmem [shape: bf16[32,128], index: 5, kind: input, shape index: {}]
  %s6 = inlined_call_operand.vmem [shape: f32[1,128], index: 6, kind: input, shape index: {}]
  %s7 = inlined_call_operand.vmem [shape: bf16[16,96], index: 7, kind: output, shape index: {0}]
  %s8 = inlined_call_operand.vmem [shape: bf16[16,128], index: 8, kind: output, shape index: {1}]
  %9 = xla_tuple %s7, %s8
  %s10 = sld [smem:[#allocation0]]
  $region46: #{encoder_forward.7} parent=0
    _
  %s12 = ssub.s32 1, %s10
  %s13 = scalar_select 0, %s12, %s10
  // Predicated region
  $region2: #{encoder_forward.7} parent=0 // pred_check
    _
  $region3: #{encoder_forward.7} parent=0 // pred_check_branch
    %15 = sbr.rel (0) target = $region5
  $region4: #{encoder_forward.7} parent=0 // pred_region
    _
  $region5: #{encoder_forward.7} parent=0 // pred_fallthru
    _
  // Predicated region
  $region6: #{encoder_forward.7} parent=0 // pred_check
    _
  $region7: #{encoder_forward.7} parent=0 // pred_check_branch
    %17 = sbr.rel (0) target = $region9
  $region8: #{encoder_forward.7} parent=0 // pred_region
    _
  $region9: #{encoder_forward.7} parent=0 // pred_fallthru
    _
  // Predicated region
  $region10: #{encoder_forward.7} parent=0 // pred_check
    _
  $region11: #{encoder_forward.7} parent=0 // pred_check_branch
    %19 = sbr.rel (0) target = $region13
  $region12: #{encoder_forward.7} parent=0 // pred_region
    _
  $region13: #{encoder_forward.7} parent=0 // pred_fallthru
    _
  // Predicated region
  $region14: #{encoder_forward.7} parent=0 // pred_check
    _
  $region15: #{encoder_forward.7} parent=0 // pred_check_branch
    %21 = sbr.rel (0) target = $region17
  $region16: #{encoder_forward.7} parent=0 // pred_region
    _
  $region17: #{encoder_forward.7} parent=0 // pred_fallthru
    _
  // Predicated region
  $region18: #{encoder_forward.7} parent=0 // pred_check
    _
  $region19: #{encoder_forward.7} parent=0 // pred_check_branch
    %23 = sbr.rel (0) target = $region21
  $region20: #{encoder_forward.7} parent=0 // pred_region
    _
  $region21: #{encoder_forward.7} parent=0 // pred_fallthru
    _
  // Predicated region
  $region22: #{encoder_forward.7} parent=0 // pred_check
    _
  $region23: #{encoder_forward.7} parent=0 // pred_check_branch
    %25 = sbr.rel (0) target = $region25
  $region24: #{encoder_forward.7} parent=0 // pred_region
    _
  $region25: #{encoder_forward.7} parent=0 // pred_fallthru
    _
  // Predicated region
  $region26: #{encoder_forward.7} parent=0 // pred_check
    _
  $region27: #{encoder_forward.7} parent=0 // pred_check_branch
    %27 = sbr.rel (0) target = $region29
  $region28: #{encoder_forward.7} parent=0 // pred_region
    _
  $region29: #{encoder_forward.7} parent=0 // pred_fallthru
    _
  %v29 = vld [vmem:[%s0] sm:$0xf]
  %v30 = vld [vmem:[%s0 + $0x4] sm:$0xf]
  %v31 = vunpack.c.l.bf16 %v29
  %v32 = vunpack.c.l.bf16 %v30
  %vm33 = vcmask 261120
  %v34 = vsel %vm33, %v31, 0.0
  %35 = vadd.xlane.f32.xlu0 %v34
  %v36 = vpop.xlane.xlu0 %35
  %v37 = vsel %vm33, %v32, 0.0
  %38 = vadd.xlane.f32.xlu0 %v37
  %v39 = vpop.xlane.xlu0 %38
  %v40 = vrcp.pop 32.0
  %v41 = vmul.f32 %v36, %v40
  %v42 = vmul.f32 %v39, %v40
  %v43 = vsub.f32 %v31, %v41
  %v44 = vsub.f32 %v32, %v42
  %v45 = vmul.f32 %v43, %v43
  %v46 = vmul.f32 %v44, %v44
  %v47 = vsel %vm33, %v45, 0.0
  %48 = vadd.xlane.f32.xlu0 %v47
  %v49 = vpop.xlane.xlu0 %48
  %v50 = vsel %vm33, %v46, 0.0
  %51 = vadd.xlane.f32.xlu0 %v50
  %v52 = vpop.xlane.xlu0 %51
  %v53 = vmul.f32 %v49, %v40
  %v54 = vmul.f32 %v52, %v40
  %v55 = vadd.f32 %v53, 1e-05
  %v56 = vadd.f32 %v54, 1e-05
  %v57 = vrsqrt.pop %v55
  %v58 = vrsqrt.pop %v56
  %v59 = vmul.f32 %v43, %v57
  %v60 = vmul.f32 %v44, %v58
  %v61 = vld [vmem:[%s1] sm:$0x1]
  %v63 = vlaneseq
  %v64 = vshrl.u32 %v63, 7
  %v65 = vsub.s32 0, %v64
  %v66 = vrot.slane %v61, %v65
  %v68 = vmul.f32 %v59, %v66
  %v69 = vmul.f32 %v60, %v66
  %v70 = vld [vmem:[%s2] sm:$0x1]
  %v72 = vlaneseq
  %v73 = vshrl.u32 %v72, 7
  %v74 = vsub.s32 0, %v73
  %v75 = vrot.slane %v70, %v74
  %v77 = vadd.f32 %v68, %v75
  %v78 = vadd.f32 %v69, %v75
  %v79 = vpack.c.bf16 %v78, %v77
  %v80 = vld [vmem:[%s3] sm:$0xf]
  %v81 = vld [vmem:[%s3 + $0x4] sm:$0xf]
  %v82 = vld [vmem:[%s3 + $0x8] sm:$0xf]
  %v83 = vld [vmem:[%s3 + $0xc] sm:$0xf]
  %v84 = vld [vmem:[%s4] sm:$0x1]
  %v86 = vlaneseq
  %v87 = vshrl.u32 %v86, 7
  %v88 = vsub.s32 0, %v87
  %v89 = vrot.slane %v84, %v88
  %v95 = vunpack.c.l.b16 %v80
  %v96 = vunpack.c.l.b16 %v81
  %v97 = vunpack.c.l.b16 %v82
  %v98 = vunpack.c.l.b16 %v83
  %v99 = vpack.c.b16 %v96, %v95
  %v100 = vpack.c.b16 %v98, %v97
  %v104 = vsel %vm33, %v79, 0
  %106 = vmatprep.subr.bf16.mxu0 0
  %107 = vmatpush1.bf16.msra.mxu0 %v99
  %108 = vmatprep.subr.bf16.mxu0 0
  %109 = vmatpush1.bf16.msra.mxu0 %v100
  %110 = vmatprep.subr.bf16.mxu0 0
  %111 = vmatpush1.bf16.msra.mxu0 0
  %112 = vmatprep.subr.bf16.mxu0 0
  %113 = vmatpush1.bf16.msra.mxu0 0
  %114 = vmatprep.subr.bf16.mxu0 0
  %115 = vmatpush1.bf16.msra.mxu0 0
  %116 = vmatprep.subr.bf16.mxu0 0
  %117 = vmatpush1.bf16.msra.mxu0 0
  %118 = vmatprep.subr.bf16.mxu0 0
  %119 = vmatpush1.bf16.msra.mxu0 0
  %120 = vmatprep.subr.bf16.mxu0 0
  %121 = vmatpush1.bf16.msra.mxu0 0
  %122 = vmatprep.subr.bf16.mxu0 0
  %123 = vmatpush1.bf16.msra.mxu0 0
  %124 = vmatprep.subr.bf16.mxu0 0
  %125 = vmatpush1.bf16.msra.mxu0 0
  %126 = vmatprep.subr.bf16.mxu0 0
  %127 = vmatpush1.bf16.msra.mxu0 0
  %128 = vmatprep.subr.bf16.mxu0 0
  %129 = vmatpush1.bf16.msra.mxu0 0
  %130 = vmatprep.subr.bf16.mxu0 0
  %131 = vmatpush1.bf16.msra.mxu0 0
  %132 = vmatprep.subr.bf16.mxu0 0
  %133 = vmatpush1.bf16.msra.mxu0 0
  %134 = vmatprep.subr.bf16.mxu0 0
  %135 = vmatpush1.bf16.msra.mxu0 0
  %136 = vmatprep.subr.bf16.mxu0 0
  %137 = vmatpush1.bf16.msra.mxu0 0
  %138 = vmatprep.mubr.bf16.mxu0 0
  %139 = vmatmul.mubr.bf16.gmra.mrb[0].mxu0 %v104
  %v140 = vpop.f32.mrb[0].mxu0
  %v141 = vadd.f32 %v89, %v140
  %v142 = vpop.f32.mrb[0].mxu0
  %v143 = vpop.f32.mrb[0].mxu0
  %v144 = vadd.f32 %v89, %v143
  %v145 = vpop.f32.mrb[0].mxu0
  %146 = vdwg.mxu0
  %v147 = vpack.c.bf16 %v144, %v141
  %v149 = vunpack.c.l.b16 %v147
  %v150 = vunpack.c.h.b16 %v147
  %v151 = vpack.c.b16 %v149, %v149
  %v152 = vpack.c.b16 %v150, %v150
  %vm155 = vcmask 781312
  %156 = vst.msk [vmem:[%s7] sm:$0xf] %vm155, %v151
  %157 = vst.msk [vmem:[%s7 + $0x4] sm:$0xf] %vm155, %v152
  %v158 = vld [vmem:[%s5] sm:$0xf]
  %v159 = vld [vmem:[%s5 + $0x4] sm:$0xf]
  %v160 = vld [vmem:[%s5 + $0x8] sm:$0xf]
  %v161 = vld [vmem:[%s5 + $0xc] sm:$0xf]
  %v162 = vld [vmem:[%s6] sm:$0x1]
  %v164 = vlaneseq
  %v165 = vshrl.u32 %v164, 7
  %v166 = vsub.s32 0, %v165
  %v167 = vrot.slane %v162, %v166
  %v173 = vunpack.c.l.b16 %v158
  %v174 = vunpack.c.l.b16 %v159
  %v175 = vunpack.c.l.b16 %v160
  %v176 = vunpack.c.l.b16 %v161
  %v177 = vpack.c.b16 %v174, %v173
  %v178 = vpack.c.b16 %v176, %v175
  %181 = vmatprep.subr.bf16.mxu0 0
  %182 = vmatpush1.bf16.msra.mxu0 %v177
  %183 = vmatprep.subr.bf16.mxu0 0
  %184 = vmatpush1.bf16.msra.mxu0 %v178
  %185 = vmatprep.subr.bf16.mxu0 0
  %186 = vmatpush1.bf16.msra.mxu0 0
  %187 = vmatprep.subr.bf16.mxu0 0
  %188 = vmatpush1.bf16.msra.mxu0 0
  %189 = vmatprep.subr.bf16.mxu0 0
  %190 = vmatpush1.bf16.msra.mxu0 0
  %191 = vmatprep.subr.bf16.mxu0 0
  %192 = vmatpush1.bf16.msra.mxu0 0
  %193 = vmatprep.subr.bf16.mxu0 0
  %194 = vmatpush1.bf16.msra.mxu0 0
  %195 = vmatprep.subr.bf16.mxu0 0
  %196 = vmatpush1.bf16.msra.mxu0 0
  %197 = vmatprep.subr.bf16.mxu0 0
  %198 = vmatpush1.bf16.msra.mxu0 0
  %199 = vmatprep.subr.bf16.mxu0 0
  %200 = vmatpush1.bf16.msra.mxu0 0
  %201 = vmatprep.subr.bf16.mxu0 0
  %202 = vmatpush1.bf16.msra.mxu0 0
  %203 = vmatprep.subr.bf16.mxu0 0
  %204 = vmatpush1.bf16.msra.mxu0 0
  %205 = vmatprep.subr.bf16.mxu0 0
  %206 = vmatpush1.bf16.msra.mxu0 0
  %207 = vmatprep.subr.bf16.mxu0 0
  %208 = vmatpush1.bf16.msra.mxu0 0
  %209 = vmatprep.subr.bf16.mxu0 0
  %210 = vmatpush1.bf16.msra.mxu0 0
  %211 = vmatprep.subr.bf16.mxu0 0
  %212 = vmatpush1.bf16.msra.mxu0 0
  %213 = vmatprep.mubr.bf16.mxu0 0
  %214 = vmatmul.mubr.bf16.gmra.mrb[0].mxu0 %v104
  %v215 = vpop.f32.mrb[0].mxu0
  %v216 = vadd.f32 %v167, %v215
  %v217 = vpop.f32.mrb[0].mxu0
  %v218 = vpop.f32.mrb[0].mxu0
  %v219 = vadd.f32 %v167, %v218
  %v220 = vpop.f32.mrb[0].mxu0
  %221 = vdwg.mxu0
  %v222 = vpack.c.bf16 %v219, %v216
  %v224 = vunpack.c.l.b16 %v222
  %v225 = vunpack.c.h.b16 %v222
  %v226 = vpack.c.b16 %v224, %v224
  %v227 = vpack.c.b16 %v225, %v225
  %230 = vst [vmem:[%s8] sm:$0xf] %v226
  %231 = vst [vmem:[%s8 + $0x4] sm:$0xf] %v227
  // Predicated region
  $region30: #{encoder_forward.7} parent=0 // pred_check
    _
  $region31: #{encoder_forward.7} parent=0 // pred_check_branch
    %233 = sbr.rel (0) target = $region33
  $region32: #{encoder_forward.7} parent=0 // pred_region
    _
  $region33: #{encoder_forward.7} parent=0 // pred_fallthru
    _
  // Predicated region
  $region34: #{encoder_forward.7} parent=0 // pred_check
    _
  $region35: #{encoder_forward.7} parent=0 // pred_check_branch
    %235 = sbr.rel (0) target = $region37
  $region36: #{encoder_forward.7} parent=0 // pred_region
    _
  $region37: #{encoder_forward.7} parent=0 // pred_fallthru
    _
  // Predicated region
  $region38: #{encoder_forward.7} parent=0 // pred_check
    _
  $region39: #{encoder_forward.7} parent=0 // pred_check_branch
    %237 = sbr.rel (0) target = $region41
  $region40: #{encoder_forward.7} parent=0 // pred_region
    _
  $region41: #{encoder_forward.7} parent=0 // pred_fallthru
    _
  // Predicated region
  $region42: #{encoder_forward.7} parent=0 // pred_check
    _
  $region43: #{encoder_forward.7} parent=0 // pred_check_branch
    %239 = sbr.rel (0) target = $region45
  $region44: #{encoder_forward.7} parent=0 // pred_region
    _
  $region45: #{encoder_forward.7} parent=0 // pred_fallthru
    _

// kernel: encoder_forward.9
$region0: #{encoder_forward.9}
  #allocation0 [shape = 'u32[]', space=smem, size = 0x4, offset = 0x4, fixed_abs, tag = 'smem constant byte address 0x4 - core index']
  #allocation1 [shape = 'u32[144,128]{1,0:T(1,128)}', space=vmem, size = 0x12000, scoped, tag = 'internal scratch']
  %s0 = inlined_call_operand.vmem [shape: bf16[16,32], index: 0, kind: input, shape index: {}]
  %s1 = inlined_call_operand.vmem [shape: bf16[16,32], index: 1, kind: input, shape index: {}]
  %s2 = inlined_call_operand.vmem [shape: bf16[32,32], index: 2, kind: input, shape index: {}]
  %s3 = inlined_call_operand.vmem [shape: f32[1,32], index: 3, kind: input, shape index: {}]
  %s4 = inlined_call_operand.vmem [shape: bf16[16,128], index: 4, kind: input, shape index: {}]
  %s5 = inlined_call_operand.vmem [shape: bf16[128,32], index: 5, kind: input, shape index: {}]
  %s6 = inlined_call_operand.vmem [shape: f32[1,32], index: 6, kind: input, shape index: {}]
  %s7 = inlined_call_operand.vmem [shape: bf16[16,32], index: 7, kind: output, shape index: {}]
  %s8 = sld [smem:[#allocation0]]
  $region38: #{encoder_forward.9} parent=0
    _
  %s10 = ssub.s32 1, %s8
  %s11 = scalar_select 0, %s10, %s8
  // Predicated region
  $region2: #{encoder_forward.9} parent=0 // pred_check
    _
  $region3: #{encoder_forward.9} parent=0 // pred_check_branch
    %13 = sbr.rel (0) target = $region5
  $region4: #{encoder_forward.9} parent=0 // pred_region
    _
  $region5: #{encoder_forward.9} parent=0 // pred_fallthru
    _
  // Predicated region
  $region6: #{encoder_forward.9} parent=0 // pred_check
    _
  $region7: #{encoder_forward.9} parent=0 // pred_check_branch
    %15 = sbr.rel (0) target = $region9
  $region8: #{encoder_forward.9} parent=0 // pred_region
    _
  $region9: #{encoder_forward.9} parent=0 // pred_fallthru
    _
  // Predicated region
  $region10: #{encoder_forward.9} parent=0 // pred_check
    _
  $region11: #{encoder_forward.9} parent=0 // pred_check_branch
    %17 = sbr.rel (0) target = $region13
  $region12: #{encoder_forward.9} parent=0 // pred_region
    _
  $region13: #{encoder_forward.9} parent=0 // pred_fallthru
    _
  // Predicated region
  $region14: #{encoder_forward.9} parent=0 // pred_check
    _
  $region15: #{encoder_forward.9} parent=0 // pred_check_branch
    %19 = sbr.rel (0) target = $region17
  $region16: #{encoder_forward.9} parent=0 // pred_region
    _
  $region17: #{encoder_forward.9} parent=0 // pred_fallthru
    _
  // Predicated region
  $region18: #{encoder_forward.9} parent=0 // pred_check
    _
  $region19: #{encoder_forward.9} parent=0 // pred_check_branch
    %21 = sbr.rel (0) target = $region21
  $region20: #{encoder_forward.9} parent=0 // pred_region
    _
  $region21: #{encoder_forward.9} parent=0 // pred_fallthru
    _
  // Predicated region
  $region22: #{encoder_forward.9} parent=0 // pred_check
    _
  $region23: #{encoder_forward.9} parent=0 // pred_check_branch
    %23 = sbr.rel (0) target = $region25
  $region24: #{encoder_forward.9} parent=0 // pred_region
    _
  $region25: #{encoder_forward.9} parent=0 // pred_fallthru
    _
  // Predicated region
  $region26: #{encoder_forward.9} parent=0 // pred_check
    _
  $region27: #{encoder_forward.9} parent=0 // pred_check_branch
    %25 = sbr.rel (0) target = $region29
  $region28: #{encoder_forward.9} parent=0 // pred_region
    _
  $region29: #{encoder_forward.9} parent=0 // pred_fallthru
    _
  %v27 = vld [vmem:[%s1] sm:$0xf]
  %v28 = vld [vmem:[%s1 + $0x4] sm:$0xf]
  %v29 = vld [vmem:[%s2] sm:$0xf]
  %v30 = vld [vmem:[%s2 + $0x4] sm:$0xf]
  %v31 = vld [vmem:[%s2 + $0x8] sm:$0xf]
  %v32 = vld [vmem:[%s2 + $0xc] sm:$0xf]
  %v33 = vld [vmem:[%s3] sm:$0x1]
  %v35 = vlaneseq
  %v36 = vshrl.u32 %v35, 7
  %v37 = vsub.s32 0, %v36
  %v38 = vrot.slane %v33, %v37
  %v42 = vunpack.c.l.b16 %v27
  %v43 = vunpack.c.l.b16 %v28
  %v44 = vpack.c.b16 %v43, %v42
  %v49 = vunpack.c.l.b16 %v29
  %v50 = vunpack.c.l.b16 %v30
  %v51 = vunpack.c.l.b16 %v31
  %v52 = vunpack.c.l.b16 %v32
  %v53 = vpack.c.b16 %v50, %v49
  %v54 = vpack.c.b16 %v52, %v51
  %vm57 = vcmask 261120
  %v59 = vsel %vm57, %v44, 0
  %61 = vmatprep.subr.bf16.mxu0 0
  %62 = vmatpush1.bf16.msra.mxu0 %v53
  %63 = vmatprep.subr.bf16.mxu0 0
  %64 = vmatpush1.bf16.msra.mxu0 %v54
  %65 = vmatprep.subr.bf16.mxu0 0
  %66 = vmatpush1.bf16.msra.mxu0 0
  %67 = vmatprep.subr.bf16.mxu0 0
  %68 = vmatpush1.bf16.msra.mxu0 0
  %69 = vmatprep.subr.bf16.mxu0 0
  %70 = vmatpush1.bf16.msra.mxu0 0
  %71 = vmatprep.subr.bf16.mxu0 0
  %72 = vmatpush1.bf16.msra.mxu0 0
  %73 = vmatprep.subr.bf16.mxu0 0
  %74 = vmatpush1.bf16.msra.mxu0 0
  %75 = vmatprep.subr.bf16.mxu0 0
  %76 = vmatpush1.bf16.msra.mxu0 0
  %77 = vmatprep.subr.bf16.mxu0 0
  %78 = vmatpush1.bf16.msra.mxu0 0
  %79 = vmatprep.subr.bf16.mxu0 0
  %80 = vmatpush1.bf16.msra.mxu0 0
  %81 = vmatprep.subr.bf16.mxu0 0
  %82 = vmatpush1.bf16.msra.mxu0 0
  %83 = vmatprep.subr.bf16.mxu0 0
  %84 = vmatpush1.bf16.msra.mxu0 0
  %85 = vmatprep.subr.bf16.mxu0 0
  %86 = vmatpush1.bf16.msra.mxu0 0
  %87 = vmatprep.subr.bf16.mxu0 0
  %88 = vmatpush1.bf16.msra.mxu0 0
  %89 = vmatprep.subr.bf16.mxu0 0
  %90 = vmatpush1.bf16.msra.mxu0 0
  %91 = vmatprep.subr.bf16.mxu0 0
  %92 = vmatpush1.bf16.msra.mxu0 0
  %93 = vmatprep.mubr.bf16.mxu0 0
  %94 = vmatmul.mubr.bf16.gmra.mrb[0].mxu0 %v59
  %v95 = vpop.f32.mrb[0].mxu0
  %v96 = vadd.f32 %v38, %v95
  %v97 = vpop.f32.mrb[0].mxu0
  %v98 = vpop.f32.mrb[0].mxu0
  %v99 = vadd.f32 %v38, %v98
  %v100 = vpop.f32.mrb[0].mxu0
  %101 = vdwg.mxu0
  %v102 = vld [vmem:[%s4] sm:$0xf]
  %v103 = vld [vmem:[%s4 + $0x4] sm:$0xf]
  %v104 = vunpack.c.l.bf16 %v102
  %v105 = vunpack.c.l.bf16 %v103
  %v106 = vmul.f32 %v104, %v104
  %v107 = vmul.f32 %v105, %v105
  %v108 = vmul.f32 %v104, %v106
  %v109 = vmul.f32 %v105, %v107
  %v110 = vmul.f32 %v108, 0.044715
  %v111 = vmul.f32 %v109, 0.044715
  %v112 = vadd.f32 %v104, %v110
  %v113 = vadd.f32 %v105, %v111
  %v114 = vmul.f32 %v112, 0.7978846
  %v115 = vmul.f32 %v113, 0.7978846
  %v116 = vtanh.pop %v114
  %v117 = vtanh.pop %v115
  %v118 = vadd.f32 %v116, 1.0
  %v119 = vadd.f32 %v117, 1.0
  %v120 = vmul.f32 %v118, 0.5
  %v121 = vmul.f32 %v119, 0.5
  %v122 = vmul.f32 %v104, %v120
  %v123 = vmul.f32 %v105, %v121
  %v124 = vpack.c.bf16 %v123, %v122
  %v125 = vld [vmem:[%s5] sm:$0xf]
  %v126 = vld [vmem:[%s5 + $0x4] sm:$0xf]
  %v127 = vld [vmem:[%s5 + $0x8] sm:$0xf]
  %v128 = vld [vmem:[%s5 + $0xc] sm:$0xf]
  %v129 = vld [vmem:[%s5 + $0x10] sm:$0xf]
  %v130 = vld [vmem:[%s5 + $0x14] sm:$0xf]
  %v131 = vld [vmem:[%s5 + $0x18] sm:$0xf]
  %v132 = vld [vmem:[%s5 + $0x1c] sm:$0xf]
  %v133 = vld [vmem:[%s5 + $0x20] sm:$0xf]
  %v134 = vld [vmem:[%s5 + $0x24] sm:$0xf]
  %v135 = vld [vmem:[%s5 + $0x28] sm:$0xf]
  %v136 = vld [vmem:[%s5 + $0x2c] sm:$0xf]
  %v137 = vld [vmem:[%s5 + $0x30] sm:$0xf]
  %v138 = vld [vmem:[%s5 + $0x34] sm:$0xf]
  %v139 = vld [vmem:[%s5 + $0x38] sm:$0xf]
  %v140 = vld [vmem:[%s5 + $0x3c] sm:$0xf]
  %v157 = vunpack.c.l.b16 %v125
  %v158 = vunpack.c.l.b16 %v126
  %v159 = vunpack.c.l.b16 %v127
  %v160 = vunpack.c.l.b16 %v128
  %v161 = vunpack.c.l.b16 %v129
  %v162 = vunpack.c.l.b16 %v130
  %v163 = vunpack.c.l.b16 %v131
  %v164 = vunpack.c.l.b16 %v132
  %v165 = vunpack.c.l.b16 %v133
  %v166 = vunpack.c.l.b16 %v134
  %v167 = vunpack.c.l.b16 %v135
  %v168 = vunpack.c.l.b16 %v136
  %v169 = vunpack.c.l.b16 %v137
  %v170 = vunpack.c.l.b16 %v138
  %v171 = vunpack.c.l.b16 %v139
  %v172 = vunpack.c.l.b16 %v140
  %v173 = vpack.c.b16 %v158, %v157
  %v174 = vpack.c.b16 %v160, %v159
  %v175 = vpack.c.b16 %v162, %v161
  %v176 = vpack.c.b16 %v164, %v163
  %v177 = vpack.c.b16 %v166, %v165
  %v178 = vpack.c.b16 %v168, %v167
  %v179 = vpack.c.b16 %v170, %v169
  %v180 = vpack.c.b16 %v172, %v171
  %189 = vmatprep.subr.bf16.mxu0 0
  %190 = vmatpush1.bf16.msra.mxu0 %v173
  %191 = vmatprep.subr.bf16.mxu0 0
  %192 = vmatpush1.bf16.msra.mxu0 %v174
  %193 = vmatprep.subr.bf16.mxu0 0
  %194 = vmatpush1.bf16.msra.mxu0 %v175
  %195 = vmatprep.subr.bf16.mxu0 0
  %196 = vmatpush1.bf16.msra.mxu0 %v176
  %197 = vmatprep.subr.bf16.mxu0 0
  %198 = vmatpush1.bf16.msra.mxu0 %v177
  %199 = vmatprep.subr.bf16.mxu0 0
  %200 = vmatpush1.bf16.msra.mxu0 %v178
  %201 = vmatprep.subr.bf16.mxu0 0
  %202 = vmatpush1.bf16.msra.mxu0 %v179
  %203 = vmatprep.subr.bf16.mxu0 0
  %204 = vmatpush1.bf16.msra.mxu0 %v180
  %205 = vmatprep.subr.bf16.mxu0 0
  %206 = vmatpush1.bf16.msra.mxu0 0
  %207 = vmatprep.subr.bf16.mxu0 0
  %208 = vmatpush1.bf16.msra.mxu0 0
  %209 = vmatprep.subr.bf16.mxu0 0
  %210 = vmatpush1.bf16.msra.mxu0 0
  %211 = vmatprep.subr.bf16.mxu0 0
  %212 = vmatpush1.bf16.msra.mxu0 0
  %213 = vmatprep.subr.bf16.mxu0 0
  %214 = vmatpush1.bf16.msra.mxu0 0
  %215 = vmatprep.subr.bf16.mxu0 0
  %216 = vmatpush1.bf16.msra.mxu0 0
  %217 = vmatprep.subr.bf16.mxu0 0
  %218 = vmatpush1.bf16.msra.mxu0 0
  %219 = vmatprep.subr.bf16.mxu0 0
  %220 = vmatpush1.bf16.msra.mxu0 0
  %221 = vmatprep.mubr.bf16.mxu0 0
  %222 = vmatmul.mubr.bf16.gmra.mrb[0].mxu0 %v124
  %v223 = vpop.f32.mrb[0].mxu0
  %v224 = vadd.f32 0.0, %v223
  %v225 = vpop.f32.mrb[0].mxu0
  %v226 = vpop.f32.mrb[0].mxu0
  %v227 = vadd.f32 0.0, %v226
  %v228 = vpop.f32.mrb[0].mxu0
  %229 = vdwg.mxu0
  %v230 = vadd.f32 %v96, %v224
  %v231 = vadd.f32 %v99, %v227
  %v232 = vld [vmem:[%s6] sm:$0x1]
  %v234 = vlaneseq
  %v235 = vshrl.u32 %v234, 7
  %v236 = vsub.s32 0, %v235
  %v237 = vrot.slane %v232, %v236
  %v239 = vadd.f32 %v230, %v237
  %v240 = vadd.f32 %v231, %v237
  %v241 = vld [vmem:[%s0] sm:$0xf]
  %v242 = vld [vmem:[%s0 + $0x4] sm:$0xf]
  %v243 = vunpack.c.l.bf16 %v241
  %v244 = vunpack.c.l.bf16 %v242
  %v245 = vadd.f32 %v243, %v239
  %v246 = vadd.f32 %v244, %v240
  %v247 = vpack.c.bf16 %v246, %v245
  %v249 = vunpack.c.l.b16 %v247
  %v250 = vunpack.c.h.b16 %v247
  %v251 = vpack.c.b16 %v249, %v249
  %v252 = vpack.c.b16 %v250, %v250
  %vm255 = vcmask 257024
  %256 = vst.msk [vmem:[%s7] sm:$0xf] %vm255, %v251
  %257 = vst.msk [vmem:[%s7 + $0x4] sm:$0xf] %vm255, %v252
  // Predicated region
  $region30: #{encoder_forward.9} parent=0 // pred_check
    _
  $region31: #{encoder_forward.9} parent=0 // pred_check_branch
    %259 = sbr.rel (0) target = $region33
  $region32: #{encoder_forward.9} parent=0 // pred_region
    _
  $region33: #{encoder_forward.9} parent=0 // pred_fallthru
    _
  // Predicated region
  $region34: #{encoder_forward.9} parent=0 // pred_check
    _
  $region35: #{encoder_forward.9} parent=0 // pred_check_branch
    %261 = sbr.rel (0) target = $region37
  $region36: #{encoder_forward.9} parent=0 // pred_region
    _
  $region37: #{encoder_forward.9} parent=0 // pred_fallthru
    _

// kernel: encoder_forward.8
$region0: #{encoder_forward.8}
  #allocation0 [shape = 'u32[]', space=smem, size = 0x4, offset = 0x4, fixed_abs, tag = 'smem constant byte address 0x4 - core index']
  #allocation1 [shape = 'u32[144,128]{1,0:T(1,128)}', space=vmem, size = 0x12000, scoped, tag = 'internal scratch']
  %s0 = inlined_call_operand.vmem [shape: bf16[2,8,32], index: 0, kind: input, shape index: {}]
  %s1 = inlined_call_operand.vmem [shape: bf16[2,8,32], index: 1, kind: input, shape index: {}]
  %s2 = inlined_call_operand.vmem [shape: bf16[2,8,32], index: 2, kind: input, shape index: {}]
  %s3 = inlined_call_operand.vmem [shape: f32[2,1,8], index: 3, kind: input, shape index: {}]
  %s4 = inlined_call_operand.vmem [shape: bf16[2,8,32], index: 4, kind: output, shape index: {}]
  %s5 = sld [smem:[#allocation0]]
  $region49: #{encoder_forward.8} parent=0
    _
  %s7 = ssub.s32 1, %s5
  %s8 = scalar_select 0, %s7, %s5
  loop: start=0, step=1, limit=4
  $region2: #{encoder_forward.8} parent=0 // loop_pre_header
    _
  $region3: #{encoder_forward.8} parent=0 // loop_header
    %s10 = sphi 0, %s14
    %p11 = scmp.ge.s32.totalorder %s10, 4
    %s17 = sphi 0, %s36
    %s18 = sphi 0, %s32
    %s19 = sphi 0, %s28
    %s20 = sphi 0, %s17
    %s21 = sphi 0, %s18
    %s22 = sphi 0, %s19
    %s23 = sphi 0, %s20
    %s24 = sphi 0, %s21
    %s25 = sphi 0, %s22
    %s43 = sphi 0, %s45
    %s46 = sphi 0, %s43
    %s47 = sphi 0, %s46
    %s63 = sphi 0, %s47
    %s71 = sphi 0, %s73
    %s74 = sphi 0, %s71
    %s75 = sphi 0, %s74
    %s91 = sphi 0, %s75
    %s99 = sphi 0, %s101
    %s102 = sphi 0, %s99
    %s103 = sphi 0, %s102
    %s119 = sphi 0, %s103
    %s125 = sphi 0, %s127
    %s128 = sphi 0, %s125
    %s129 = sphi 0, %s128
    %s145 = sphi 0, %s129
    %s155 = sphi 0, %s157
    %s158 = sphi 0, %s155
    %s159 = sphi 0, %s158
    %s175 = sphi 0, %s159
  $region4: #{encoder_forward.8} parent=0 // loop_header_branch
    %13 = sbr.rel (%p11) target = $region8
  $region5: #{encoder_forward.8} parent=0 // loop_body
    %s15 = ssub.s32 %s10, 1
    %s16 = ssub.s32 %s10, 2
    %s26 = sadd.s32 1, %s19
    %p27 = scmp.ge.s32.totalorder %s26, 1
    %s28 = scalar_select %p27, 0, %s26
    %s29 = sadd.s32 1, %s18
    %s30 = scalar_select %p27, %s29, %s18
    %p31 = scmp.ge.s32.totalorder %s30, 1
    %s32 = scalar_select %p31, 0, %s30
    %s33 = sadd.s32 1, %s17
    %s34 = scalar_select %p31, %s33, %s17
    %p35 = scmp.ge.s32.totalorder %s34, 2
    %s36 = scalar_select %p35, 0, %s34
    %s37 = ssub.s32 %s17, %s36
    %s38 = ssub.s32 %s19, %s28
    %s39 = sor.u32 %s37, %s38
    %s40 = ssub.s32 %s18, %s32
    %s41 = sor.u32 %s39, %s40
    %p42 = scmp.eq.s32.totalorder %s41, 0
    %s44 = sadd.s32 %s43, 1
    %s45 = scalar_select %p42, %s43, %s44
    %p48 = pneg %p42
    %p49 = scmp.eq.s32.totalorder %s10, 1
    %p50 = por %p48, %p49
    %p51 = scmp.ne.s32.totalorder %s43, %s46
    %p52 = scmp.eq.s32.totalorder %s10, 0
    %p53 = por %p51, %p52
    %p54 = scmp.ne.s32.totalorder %s43, %s46
    %p55 = scmp.eq.s32.totalorder %s15, 1
    %p56 = por %p54, %p55
    %p57 = scmp.ne.s32.totalorder %s46, %s47
    %p58 = scmp.eq.s32.totalorder %s15, 0
    %p59 = por %p57, %p58
    %p60 = scmp.ne.s32.totalorder %s46, %s47
    %p61 = scmp.eq.s32.totalorder %s16, 1
    %p62 = por %p60, %p61
    %p64 = scmp.ne.s32.totalorder %s47, %s63
    %p65 = scmp.eq.s32.totalorder %s16, 0
    %p66 = por %p64, %p65
    %s67 = ssub.s32 %s17, %s36
    %s68 = ssub.s32 %s18, %s32
    %s69 = sor.u32 %s67, %s68
    %p70 = scmp.eq.s32.totalorder %s69, 0
    %s72 = sadd.s32 %s71, 1
    %s73 = scalar_select %p70, %s71, %s72
    %p76 = pneg %p70
    %p77 = scmp.eq.s32.totalorder %s10, 1
    %p78 = por %p76, %p77
    %p79 = scmp.ne.s32.totalorder %s71, %s74
    %p80 = scmp.eq.s32.totalorder %s10, 0
    %p81 = por %p79, %p80
    %p82 = scmp.ne.s32.totalorder %s71, %s74
    %p83 = scmp.eq.s32.totalorder %s15, 1
    %p84 = por %p82, %p83
    %p85 = scmp.ne.s32.totalorder %s74, %s75
    %p86 = scmp.eq.s32.totalorder %s15, 0
    %p87 = por %p85, %p86
    %p88 = scmp.ne.s32.totalorder %s74, %s75
    %p89 = scmp.eq.s32.totalorder %s16, 1
    %p90 = por %p88, %p89
    %p92 = scmp.ne.s32.totalorder %s75, %s91
    %p93 = scmp.eq.s32.totalorder %s16, 0
    %p94 = por %p92, %p93
    %s95 = ssub.s32 %s17, %s36
    %s96 = ssub.s32 %s18, %s32
    %s97 = sor.u32 %s95, %s96
    %p98 = scmp.eq.s32.totalorder %s97, 0
    %s100 = sadd.s32 %s99, 1
    %s101 = scalar_select %p98, %s99, %s100
    %p104 = pneg %p98
    %p105 = scmp.eq.s32.totalorder %s10, 1
    %p106 = por %p104, %p105
    %p107 = scmp.ne.s32.totalorder %s99, %s102
    %p108 = scmp.eq.s32.totalorder %s10, 0
    %p109 = por %p107, %p108
    %p110 = scmp.ne.s32.totalorder %s99, %s102
    %p111 = scmp.eq.s32.totalorder %s15, 1
    %p112 = por %p110, %p111
    %p113 = scmp.ne.s32.totalorder %s102, %s103
    %p114 = scmp.eq.s32.totalorder %s15, 0
    %p115 = por %p113, %p114
    %p116 = scmp.ne.s32.totalorder %s102, %s103
    %p117 = scmp.eq.s32.totalorder %s16, 1
    %p118 = por %p116, %p117
    %p120 = scmp.ne.s32.totalorder %s103, %s119
    %p121 = scmp.eq.s32.totalorder %s16, 0
    %p122 = por %p120, %p121
    %s123 = ssub.s32 %s17, %s36
    %p124 = scmp.eq.s32.totalorder %s123, 0
    %s126 = sadd.s32 %s125, 1
    %s127 = scalar_select %p124, %s125, %s126
    %p130 = pneg %p124
    %p131 = scmp.eq.s32.totalorder %s10, 1
    %p132 = por %p130, %p131
    %p133 = scmp.ne.s32.totalorder %s125, %s128
    %p134 = scmp.eq.s32.totalorder %s10, 0
    %p135 = por %p133, %p134
    %p136 = scmp.ne.s32.totalorder %s125, %s128
    %p137 = scmp.eq.s32.totalorder %s15, 1
    %p138 = por %p136, %p137
    %p139 = scmp.ne.s32.totalorder %s128, %s129
    %p140 = scmp.eq.s32.totalorder %s15, 0
    %p141 = por %p139, %p140
    %p142 = scmp.ne.s32.totalorder %s128, %s129
    %p143 = scmp.eq.s32.totalorder %s16, 1
    %p144 = por %p142, %p143
    %p146 = scmp.ne.s32.totalorder %s129, %s145
    %p147 = scmp.eq.s32.totalorder %s16, 0
    %p148 = por %p146, %p147
    %s149 = ssub.s32 %s17, %s36
    %s150 = ssub.s32 %s19, %s28
    %s151 = sor.u32 %s149, %s150
    %s152 = ssub.s32 %s18, %s32
    %s153 = sor.u32 %s151, %s152
    %p154 = scmp.eq.s32.totalorder %s153, 0
    %s156 = sadd.s32 %s155, 1
    %s157 = scalar_select %p154, %s155, %s156
    %p160 = pneg %p154
    %p161 = scmp.eq.s32.totalorder %s10, 1
    %p162 = por %p160, %p161
    %p163 = scmp.ne.s32.totalorder %s155, %s158
    %p164 = scmp.eq.s32.totalorder %s10, 0
    %p165 = por %p163, %p164
    %p166 = scmp.ne.s32.totalorder %s155, %s158
    %p167 = scmp.eq.s32.totalorder %s15, 1
    %p168 = por %p166, %p167
    %p169 = scmp.ne.s32.totalorder %s158, %s159
    %p170 = scmp.eq.s32.totalorder %s15, 0
    %p171 = por %p169, %p170
    %p172 = scmp.ne.s32.totalorder %s158, %s159
    %p173 = scmp.eq.s32.totalorder %s16, 1
    %p174 = por %p172, %p173
    %p176 = scmp.ne.s32.totalorder %s159, %s175
    %p177 = scmp.eq.s32.totalorder %s16, 0
    %p178 = por %p176, %p177
    %p179 = scmp.le.s32.totalorder 1, %s10
    %p180 = scmp.lt.s32.totalorder %s10, 3
    %p181 = pnand %p179, %p180
    %p182 = pneg %p181
    // Predicated region
    $region9: #{encoder_forward.8} parent=5 // pred_check
      _
    $region10: #{encoder_forward.8} parent=5 // pred_check_branch
      %184 = sbr.rel (%p181) target = $region12
    $region11: #{encoder_forward.8} parent=5 // pred_region
      %s185 = ssub.s32 %s10, 1
    $region12: #{encoder_forward.8} parent=5 // pred_fallthru
      _
    %p186 = scmp.lt.s32.totalorder %s10, 2
    // Predicated region
    $region13: #{encoder_forward.8} parent=5 // pred_check
      %p187 = pneg %p186
    $region14: #{encoder_forward.8} parent=5 // pred_check_branch
      %189 = sbr.rel (%p187) target = $region16
    $region15: #{encoder_forward.8} parent=5 // pred_region
      // Predicated region
      $region17: #{encoder_forward.8} parent=15 // pred_check
        %p190 = pneg %p53
      $region18: #{encoder_forward.8} parent=15 // pred_check_branch
        %192 = sbr.rel (%p190) target = $region20
      $region19: #{encoder_forward.8} parent=15 // pred_region
        %p193 = scmp.lt.s32.totalorder %s17, 1
        %s194 = scalar_select %p193, %s17, 1
        %p195 = scmp.lt.s32.totalorder %s19, 0
        %s196 = scalar_select %p195, %s19, 0
        %p197 = scmp.lt.s32.totalorder %s18, 0
        %s198 = scalar_select %p197, %s18, 0
        %s199 = sadd.s32 %s198, %s196
        %s200 = sadd.s32 %s199, %s194
        %s201 = smul.addr %s200, 4
        %s202 = scalar_lea.vmem %s0, %s201
      $region20: #{encoder_forward.8} parent=15 // pred_fallthru
        _
      // Predicated region
      $region21: #{encoder_forward.8} parent=15 // pred_check
        %p203 = pneg %p81
      $region22: #{encoder_forward.8} parent=15 // pred_check_branch
        %205 = sbr.rel (%p203) target = $region24
      $region23: #{encoder_forward.8} parent=15 // pred_region
        %p206 = scmp.lt.s32.totalorder %s17, 1
        %s207 = scalar_select %p206, %s17, 1
        %p208 = scmp.lt.s32.totalorder %s18, 0
        %s209 = scalar_select %p208, %s18, 0
        %s210 = sadd.s32 %s209, %s207
        %s211 = smul.addr %s210, 4
        %s212 = scalar_lea.vmem %s1, %s211
      $region24: #{encoder_forward.8} parent=15 // pred_fallthru
        _
      // Predicated region
      $region25: #{encoder_forward.8} parent=15 // pred_check
        %p213 = pneg %p109
      $region26: #{encoder_forward.8} parent=15 // pred_check_branch
        %215 = sbr.rel (%p213) target = $region28
      $region27: #{encoder_forward.8} parent=15 // pred_region
        %p216 = scmp.lt.s32.totalorder %s17, 1
        %s217 = scalar_select %p216, %s17, 1
        %p218 = scmp.lt.s32.totalorder %s18, 0
        %s219 = scalar_select %p218, %s18, 0
        %s220 = sadd.s32 %s219, %s217
        %s221 = smul.addr %s220, 4
        %s222 = scalar_lea.vmem %s2, %s221
      $region28: #{encoder_forward.8} parent=15 // pred_fallthru
        _
      // Predicated region
      $region29: #{encoder_forward.8} parent=15 // pred_check
        %p223 = pneg %p135
      $region30: #{encoder_forward.8} parent=15 // pred_check_branch
        %225 = sbr.rel (%p223) target = $region32
      $region31: #{encoder_forward.8} parent=15 // pred_region
        %p226 = scmp.lt.s32.totalorder %s17, 1
        %s227 = scalar_select %p226, %s17, 1
        %s228 = scalar_lea.vmem %s3, %s227
      $region32: #{encoder_forward.8} parent=15 // pred_fallthru
        _
    $region16: #{encoder_forward.8} parent=5 // pred_fallthru
      _
    %p229 = scmp.le.s32.totalorder 1, %s10
    %p230 = scmp.lt.s32.totalorder %s10, 3
    %p231 = pnand %p229, %p230
    %p232 = pneg %p231
    // Predicated region
    $region33: #{encoder_forward.8} parent=5 // pred_check
      _
    $region34: #{encoder_forward.8} parent=5 // pred_check_branch
      %234 = sbr.rel (%p231) target = $region36
    $region35: #{encoder_forward.8} parent=5 // pred_region
      %s235 = ssub.s32 %s10, 1
      %p236 = scmp.lt.s32.totalorder %s20, 1
      %s237 = scalar_select %p236, %s20, 1
      %p238 = scmp.lt.s32.totalorder %s22, 0
      %s239 = scalar_select %p238, %s22, 0
      %p240 = scmp.lt.s32.totalorder %s21, 0
      %s241 = scalar_select %p240, %s21, 0
      %s242 = sadd.s32 %s241, %s239
      %s243 = sadd.s32 %s242, %s237
      %s244 = smul.addr %s243, 4
      %s245 = scalar_lea.vmem %s0, %s244
      %p246 = pneg %p59
      %p247 = pneg %p56
      %p248 = scmp.lt.s32.totalorder %s20, 1
      %s249 = scalar_select %p248, %s20, 1
      %p250 = scmp.lt.s32.totalorder %s21, 0
      %s251 = scalar_select %p250, %s21, 0
      %s252 = sadd.s32 %s251, %s249
      %s253 = smul.addr %s252, 4
      %s254 = scalar_lea.vmem %s1, %s253
      %p255 = pneg %p87
      %p256 = pneg %p84
      %p257 = scmp.lt.s32.totalorder %s20, 1
      %s258 = scalar_select %p257, %s20, 1
      %p259 = scmp.lt.s32.totalorder %s21, 0
      %s260 = scalar_select %p259, %s21, 0
      %s261 = sadd.s32 %s260, %s258
      %s262 = smul.addr %s261, 4
      %s263 = scalar_lea.vmem %s2, %s262
      %p264 = pneg %p115
      %p265 = pneg %p112
      %p266 = scmp.lt.s32.totalorder %s20, 1
      %s267 = scalar_select %p266, %s20, 1
      %s268 = scalar_lea.vmem %s3, %s267
      %p269 = pneg %p141
      %p270 = pneg %p138
      %p271 = pneg %p171
      %p272 = pneg %p168
      %p273 = scmp.lt.s32.totalorder %s20, 1
      %s274 = scalar_select %p273, %s20, 1
      %p275 = scmp.lt.s32.totalorder %s22, 0
      %s276 = scalar_select %p275, %s22, 0
      %p277 = scmp.lt.s32.totalorder %s21, 0
      %s278 = scalar_select %p277, %s21, 0
      %s279 = sadd.s32 %s278, %s276
      %s280 = sadd.s32 %s279, %s274
      %s281 = smul.addr %s280, 4
      %s282 = scalar_lea.vmem %s4, %s281
      %p283 = scmp.lt.s32.totalorder %s20, 1
      %s284 = scalar_select %p283, %s20, 1
      %p285 = scmp.lt.s32.totalorder %s22, 0
      %s286 = scalar_select %p285, %s22, 0
      %p287 = scmp.lt.s32.totalorder %s21, 0
      %s288 = scalar_select %p287, %s21, 0
      %s289 = sadd.s32 %s288, %s286
      %s290 = sadd.s32 %s289, %s284
      %s291 = smul.addr %s290, 4
      %s292 = scalar_lea.vmem %s0, %s291
      %p293 = scmp.lt.s32.totalorder %s20, 1
      %s294 = scalar_select %p293, %s20, 1
      %p295 = scmp.lt.s32.totalorder %s21, 0
      %s296 = scalar_select %p295, %s21, 0
      %s297 = sadd.s32 %s296, %s294
      %s298 = smul.addr %s297, 4
      %s299 = scalar_lea.vmem %s1, %s298
      %p300 = scmp.lt.s32.totalorder %s20, 1
      %s301 = scalar_select %p300, %s20, 1
      %p302 = scmp.lt.s32.totalorder %s21, 0
      %s303 = scalar_select %p302, %s21, 0
      %s304 = sadd.s32 %s303, %s301
      %s305 = smul.addr %s304, 4
      %s306 = scalar_lea.vmem %s2, %s305
      %p307 = scmp.lt.s32.totalorder %s20, 1
      %s308 = scalar_select %p307, %s20, 1
      %s309 = scalar_lea.vmem %s3, %s308
      %p310 = scmp.lt.s32.totalorder %s20, 1
      %s311 = scalar_select %p310, %s20, 1
      %p312 = scmp.lt.s32.totalorder %s22, 0
      %s313 = scalar_select %p312, %s22, 0
      %p314 = scmp.lt.s32.totalorder %s21, 0
      %s315 = scalar_select %p314, %s21, 0
      %s316 = sadd.s32 %s315, %s313
      %s317 = sadd.s32 %s316, %s311
      %s318 = smul.addr %s317, 4
      %s319 = scalar_lea.vmem %s4, %s318
      %v321 = vld [vmem:[%s292] sm:$0xf]
      %v322 = vunpack.c.l.bf16 %v321
      %v323 = vmul.f32 %v322, 0.35355338
      %v324 = vpack.c.bf16 %v323, %v323
      %v325 = vld [vmem:[%s299] sm:$0xf]
      %v326 = vld [vmem:[%s306] sm:$0xf]
      %s327 = smul.u32 %s22, 8
      %v328 = vlaneseq
      %v329 = vshrl.u32 %v328, 7
      %v330 = vstv %s327
      %v331 = vadd.s32 %v330, %v329
      %v332 = vlaneseq
      %v333 = vand.u32 %v332, 127
      %vm334 = vcmp.le.s32.totalorder %v333, %v331
      %v335 = vld [vmem:[%s309] sm:$0x1]
      %vm336 = vcmp.gt.f32.partialorder %v335, 0.5
      %v337 = vsel %vm336, 1, 0
      %v338 = vlaneseq
      %v339 = vshrl.u32 %v338, 7
      %v340 = vsub.s32 0, %v339
      %v341 = vrot.slane %v337, %v340
      %vm342 = vcmp.eq.s32.totalorder %v341, 1
      %vm343 = vmand %vm334, %vm342
      %vm344 = vcmask 64512
      %v346 = vsel %vm344, %v324, 0
      %v349 = vsel %vm344, %v325, 0
      %351 = vmatprep.subr.bf16.mxu0 0
      %352 = vmatpush1.bf16.xpose.msra.mxu0 %v349
      %353 = vmatprep.subr.bf16.mxu0 0
      %354 = vmatpush1.bf16.xpose.msra.mxu0 0
      %355 = vmatprep.subr.bf16.mxu0 0
      %356 = vmatpush1.bf16.xpose.msra.mxu0 0
      %357 = vmatprep.subr.bf16.mxu0 0
      %358 = vmatpush1.bf16.xpose.msra.mxu0 0
      %359 = vmatprep.subr.bf16.mxu0 0
      %360 = vmatpush1.bf16.xpose.msra.mxu0 0
      %361 = vmatprep.subr.bf16.mxu0 0
      %362 = vmatpush1.bf16.xpose.msra.mxu0 0
      %363 = vmatprep.subr.bf16.mxu0 0
      %364 = vmatpush1.bf16.xpose.msra.mxu0 0
      %365 = vmatprep.subr.bf16.mxu0 0
      %366 = vmatpush1.bf16.xpose.msra.mxu0 0
      %367 = vmatprep.subr.bf16.mxu0 0
      %368 = vmatpush1.bf16.xpose.msra.mxu0 0
      %369 = vmatprep.subr.bf16.mxu0 0
      %370 = vmatpush1.bf16.xpose.msra.mxu0 0
      %371 = vmatprep.subr.bf16.mxu0 0
      %372 = vmatpush1.bf16.xpose.msra.mxu0 0
      %373 = vmatprep.subr.bf16.mxu0 0
      %374 = vmatpush1.bf16.xpose.msra.mxu0 0
      %375 = vmatprep.subr.bf16.mxu0 0
      %376 = vmatpush1.bf16.xpose.msra.mxu0 0
      %377 = vmatprep.subr.bf16.mxu0 0
      %378 = vmatpush1.bf16.xpose.msra.mxu0 0
      %379 = vmatprep.subr.bf16.mxu0 0
      %380 = vmatpush1.bf16.xpose.msra.mxu0 0
      %381 = vmatprep.subr.bf16.mxu0 0
      %382 = vmatpush1.bf16.xpose.msra.mxu0 0
      %383 = vmatprep.mubr.bf16.mxu0 0
      %384 = vmatmul.mubr.bf16.gmra.mrb[0].mxu0 %v346
      %v385 = vpop.f32.mrb[0].mxu0
      %v386 = vadd.f32 0.0, %v385
      %v387 = vpop.f32.mrb[0].mxu0
      %v388 = vpop.f32.mrb[0].mxu0
      %v389 = vpop.f32.mrb[0].mxu0
      %390 = vdwg.mxu0
      %v391 = vsel %vm343, %v386, -1e+30
      %v392 = vsel %vm344, %v391, -inf
      %393 = vmax.xlane.f32.xlu0 %v392
      %v394 = vpop.xlane.xlu0 %393
      %v395 = vsub.f32 %v391, %v394
      %v396 = vmul.f32 %v395, 1.442695
      %v397 = vpow.pop %v396
      %v398 = vsel %vm344, %v397, 0.0
      %399 = vadd.xlane.f32.xlu0 %v398
      %v400 = vpop.xlane.xlu0 %399
      %v401 = vrcp.pop %v400
      %v402 = vmul.f32 %v397, %v401
      %v403 = vpack.c.bf16 %v402, %v402
      %v405 = vsel %vm344, %v403, 0
      %vm407 = vcmask 1043456
      %v409 = vsel %vm407, %v326, 0
      %411 = vmatprep.subr.bf16.mxu0 0
      %412 = vmatpush1.bf16.msra.mxu0 %v409
      %413 = vmatprep.subr.bf16.mxu0 0
      %414 = vmatpush1.bf16.msra.mxu0 0
      %415 = vmatprep.subr.bf16.mxu0 0
      %416 = vmatpush1.bf16.msra.mxu0 0
      %417 = vmatprep.subr.bf16.mxu0 0
      %418 = vmatpush1.bf16.msra.mxu0 0
      %419 = vmatprep.subr.bf16.mxu0 0
      %420 = vmatpush1.bf16.msra.mxu0 0
      %421 = vmatprep.subr.bf16.mxu0 0
      %422 = vmatpush1.bf16.msra.mxu0 0
      %423 = vmatprep.subr.bf16.mxu0 0
      %424 = vmatpush1.bf16.msra.mxu0 0
      %425 = vmatprep.subr.bf16.mxu0 0
      %426 = vmatpush1.bf16.msra.mxu0 0
      %427 = vmatprep.subr.bf16.mxu0 0
      %428 = vmatpush1.bf16.msra.mxu0 0
      %429 = vmatprep.subr.bf16.mxu0 0
      %430 = vmatpush1.bf16.msra.mxu0 0
      %431 = vmatprep.subr.bf16.mxu0 0
      %432 = vmatpush1.bf16.msra.mxu0 0
      %433 = vmatprep.subr.bf16.mxu0 0
      %434 = vmatpush1.bf16.msra.mxu0 0
      %435 = vmatprep.subr.bf16.mxu0 0
      %436 = vmatpush1.bf16.msra.mxu0 0
      %437 = vmatprep.subr.bf16.mxu0 0
      %438 = vmatpush1.bf16.msra.mxu0 0
      %439 = vmatprep.subr.bf16.mxu0 0
      %440 = vmatpush1.bf16.msra.mxu0 0
      %441 = vmatprep.subr.bf16.mxu0 0
      %442 = vmatpush1.bf16.msra.mxu0 0
      %443 = vmatprep.mubr.bf16.mxu0 0
      %444 = vmatmul.mubr.bf16.gmra.mrb[0].mxu0 %v405
      %v445 = vpop.f32.mrb[0].mxu0
      %v446 = vadd.f32 0.0, %v445
      %v447 = vpop.f32.mrb[0].mxu0
      %v448 = vpop.f32.mrb[0].mxu0
      %v449 = vpop.f32.mrb[0].mxu0
      %450 = vdwg.mxu0
      %v451 = vpack.c.bf16 %v446, %v446
      %vm452 = vcmask 60416
      %453 = vst.msk [vmem:[%s319] sm:$0xf] %vm452, %v451
      %455 = vrot.lane.b32.xlu0 %v324, 120
      %v456 = vpop.permute.xlu0 %455
      %v458 = vunpack.c.l.b16 %v325
      %v459 = vpack.c.b16 %v458, %v458
      %460 = vrot.lane.b32.xlu0 %v459, 120
      %v461 = vpop.permute.xlu0 %460
      %v463 = vsel %vm344, %v456, 0
      %v466 = vsel %vm344, %v461, 0
      %468 = vmatprep.subr.bf16.mxu0 0
      %469 = vmatpush1.bf16.xpose.msra.mxu0 %v466
      %470 = vmatprep.subr.bf16.mxu0 0
      %471 = vmatpush1.bf16.xpose.msra.mxu0 0
      %472 = vmatprep.subr.bf16.mxu0 0
      %473 = vmatpush1.bf16.xpose.msra.mxu0 0
      %474 = vmatprep.subr.bf16.mxu0 0
      %475 = vmatpush1.bf16.xpose.msra.mxu0 0
      %476 = vmatprep.subr.bf16.mxu0 0
      %477 = vmatpush1.bf16.xpose.msra.mxu0 0
      %478 = vmatprep.subr.bf16.mxu0 0
      %479 = vmatpush1.bf16.xpose.msra.mxu0 0
      %480 = vmatprep.subr.bf16.mxu0 0
      %481 = vmatpush1.bf16.xpose.msra.mxu0 0
      %482 = vmatprep.subr.bf16.mxu0 0
      %483 = vmatpush1.bf16.xpose.msra.mxu0 0
      %484 = vmatprep.subr.bf16.mxu0 0
      %485 = vmatpush1.bf16.xpose.msra.mxu0 0
      %486 = vmatprep.subr.bf16.mxu0 0
      %487 = vmatpush1.bf16.xpose.msra.mxu0 0
      %488 = vmatprep.subr.bf16.mxu0 0
      %489 = vmatpush1.bf16.xpose.msra.mxu0 0
      %490 = vmatprep.subr.bf16.mxu0 0
      %491 = vmatpush1.bf16.xpose.msra.mxu0 0
      %492 = vmatprep.subr.bf16.mxu0 0
      %493 = vmatpush1.bf16.xpose.msra.mxu0 0
      %494 = vmatprep.subr.bf16.mxu0 0
      %495 = vmatpush1.bf16.xpose.msra.mxu0 0
      %496 = vmatprep.subr.bf16.mxu0 0
      %497 = vmatpush1.bf16.xpose.msra.mxu0 0
      %498 = vmatprep.subr.bf16.mxu0 0
      %499 = vmatpush1.bf16.xpose.msra.mxu0 0
      %500 = vmatprep.mubr.bf16.mxu0 0
      %501 = vmatmul.mubr.bf16.gmra.mrb[0].mxu0 %v463
      %v502 = vpop.f32.mrb[0].mxu0
      %v503 = vadd.f32 0.0, %v502
      %v504 = vpop.f32.mrb[0].mxu0
      %v505 = vpop.f32.mrb[0].mxu0
      %v506 = vpop.f32.mrb[0].mxu0
      %507 = vdwg.mxu0
      %v508 = vsel %vm343, %v503, -1e+30
      %v509 = vsel %vm344, %v508, -inf
      %510 = vmax.xlane.f32.xlu0 %v509
      %v511 = vpop.xlane.xlu0 %510
      %v512 = vsub.f32 %v508, %v511
      %v513 = vmul.f32 %v512, 1.442695
      %v514 = vpow.pop %v513
      %v515 = vsel %vm344, %v514, 0.0
      %516 = vadd.xlane.f32.xlu0 %v515
      %v517 = vpop.xlane.xlu0 %516
      %v518 = vrcp.pop %v517
      %v519 = vmul.f32 %v514, %v518
      %v520 = vpack.c.bf16 %v519, %v519
      %v522 = vunpack.c.l.b16 %v326
      %v523 = vpack.c.b16 %v522, %v522
      %524 = vrot.lane.b32.xlu0 %v523, 120
      %v525 = vpop.permute.xlu0 %524
      %v527 = vsel %vm344, %v520, 0
      %v530 = vsel %vm407, %v525, 0
      %532 = vmatprep.subr.bf16.mxu0 0
      %533 = vmatpush1.bf16.msra.mxu0 %v530
      %534 = vmatprep.subr.bf16.mxu0 0
      %535 = vmatpush1.bf16.msra.mxu0 0
      %536 = vmatprep.subr.bf16.mxu0 0
      %537 = vmatpush1.bf16.msra.mxu0 0
      %538 = vmatprep.subr.bf16.mxu0 0
      %539 = vmatpush1.bf16.msra.mxu0 0
      %540 = vmatprep.subr.bf16.mxu0 0
      %541 = vmatpush1.bf16.msra.mxu0 0
      %542 = vmatprep.subr.bf16.mxu0 0
      %543 = vmatpush1.bf16.msra.mxu0 0
      %544 = vmatprep.subr.bf16.mxu0 0
      %545 = vmatpush1.bf16.msra.mxu0 0
      %546 = vmatprep.subr.bf16.mxu0 0
      %547 = vmatpush1.bf16.msra.mxu0 0
      %548 = vmatprep.subr.bf16.mxu0 0
      %549 = vmatpush1.bf16.msra.mxu0 0
      %550 = vmatprep.subr.bf16.mxu0 0
      %551 = vmatpush1.bf16.msra.mxu0 0
      %552 = vmatprep.subr.bf16.mxu0 0
      %553 = vmatpush1.bf16.msra.mxu0 0
      %554 = vmatprep.subr.bf16.mxu0 0
      %555 = vmatpush1.bf16.msra.mxu0 0
      %556 = vmatprep.subr.bf16.mxu0 0
      %557 = vmatpush1.bf16.msra.mxu0 0
      %558 = vmatprep.subr.bf16.mxu0 0
      %559 = vmatpush1.bf16.msra.mxu0 0
      %560 = vmatprep.subr.bf16.mxu0 0
      %561 = vmatpush1.bf16.msra.mxu0 0
      %562 = vmatprep.subr.bf16.mxu0 0
      %563 = vmatpush1.bf16.msra.mxu0 0
      %564 = vmatprep.mubr.bf16.mxu0 0
      %565 = vmatmul.mubr.bf16.gmra.mrb[0].mxu0 %v527
      %v566 = vpop.f32.mrb[0].mxu0
      %v567 = vadd.f32 0.0, %v566
      %v568 = vpop.f32.mrb[0].mxu0
      %v569 = vpop.f32.mrb[0].mxu0
      %v570 = vpop.f32.mrb[0].mxu0
      %571 = vdwg.mxu0
      %v572 = vpack.c.bf16 %v567, %v567
      %v574 = vunpack.c.l.b16 %v572
      %v575 = vpack.c.b16 %v574, %v574
      %576 = vrot.lane.b32.xlu0 %v575, 8
      %v577 = vpop.permute.xlu0 %576
      %vm579 = vcmask 126016
      %580 = vst.msk [vmem:[%s319] sm:$0xf] %vm579, %v577
      %581 = vrot.lane.b32.xlu0 %v324, 112
      %v582 = vpop.permute.xlu0 %581
      %583 = vrot.lane.b32.xlu0 %v459, 112
      %v584 = vpop.permute.xlu0 %583
      %v586 = vsel %vm344, %v582, 0
      %v589 = vsel %vm344, %v584, 0
      %591 = vmatprep.subr.bf16.mxu0 0
      %592 = vmatpush1.bf16.xpose.msra.mxu0 %v589
      %593 = vmatprep.subr.bf16.mxu0 0
      %594 = vmatpush1.bf16.xpose.msra.mxu0 0
      %595 = vmatprep.subr.bf16.mxu0 0
      %596 = vmatpush1.bf16.xpose.msra.mxu0 0
      %597 = vmatprep.subr.bf16.mxu0 0
      %598 = vmatpush1.bf16.xpose.msra.mxu0 0
      %599 = vmatprep.subr.bf16.mxu0 0
      %600 = vmatpush1.bf16.xpose.msra.mxu0 0
      %601 = vmatprep.subr.bf16.mxu0 0
      %602 = vmatpush1.bf16.xpose.msra.mxu0 0
      %603 = vmatprep.subr.bf16.mxu0 0
      %604 = vmatpush1.bf16.xpose.msra.mxu0 0
      %605 = vmatprep.subr.bf16.mxu0 0
      %606 = vmatpush1.bf16.xpose.msra.mxu0 0
      %607 = vmatprep.subr.bf16.mxu0 0
      %608 = vmatpush1.bf16.xpose.msra.mxu0 0
      %609 = vmatprep.subr.bf16.mxu0 0
      %610 = vmatpush1.bf16.xpose.msra.mxu0 0
      %611 = vmatprep.subr.bf16.mxu0 0
      %612 = vmatpush1.bf16.xpose.msra.mxu0 0
      %613 = vmatprep.subr.bf16.mxu0 0
      %614 = vmatpush1.bf16.xpose.msra.mxu0 0
      %615 = vmatprep.subr.bf16.mxu0 0
      %616 = vmatpush1.bf16.xpose.msra.mxu0 0
      %617 = vmatprep.subr.bf16.mxu0 0
      %618 = vmatpush1.bf16.xpose.msra.mxu0 0
      %619 = vmatprep.subr.bf16.mxu0 0
      %620 = vmatpush1.bf16.xpose.msra.mxu0 0
      %621 = vmatprep.subr.bf16.mxu0 0
      %622 = vmatpush1.bf16.xpose.msra.mxu0 0
      %623 = vmatprep.mubr.bf16.mxu0 0
      %624 = vmatmul.mubr.bf16.gmra.mrb[0].mxu0 %v586
      %v625 = vpop.f32.mrb[0].mxu0
      %v626 = vadd.f32 0.0, %v625
      %v627 = vpop.f32.mrb[0].mxu0
      %v628 = vpop.f32.mrb[0].mxu0
      %v629 = vpop.f32.mrb[0].mxu0
      %630 = vdwg.mxu0
      %v631 = vsel %vm343, %v626, -1e+30
      %v632 = vsel %vm344, %v631, -inf
      %633 = vmax.xlane.f32.xlu0 %v632
      %v634 = vpop.xlane.xlu0 %633
      %v635 = vsub.f32 %v631, %v634
      %v636 = vmul.f32 %v635, 1.442695
      %v637 = vpow.pop %v636
      %v638 = vsel %vm344, %v637, 0.0
      %639 = vadd.xlane.f32.xlu0 %v638
      %v640 = vpop.xlane.xlu0 %639
      %v641 = vrcp.pop %v640
      %v642 = vmul.f32 %v637, %v641
      %v643 = vpack.c.bf16 %v642, %v642
      %644 = vrot.lane.b32.xlu0 %v523, 112
      %v645 = vpop.permute.xlu0 %644
      %v647 = vsel %vm344, %v643, 0
      %v650 = vsel %vm407, %v645, 0
      %652 = vmatprep.subr.bf16.mxu0 0
      %653 = vmatpush1.bf16.msra.mxu0 %v650
      %654 = vmatprep.subr.bf16.mxu0 0
      %655 = vmatpush1.bf16.msra.mxu0 0
      %656 = vmatprep.subr.bf16.mxu0 0
      %657 = vmatpush1.bf16.msra.mxu0 0
      %658 = vmatprep.subr.bf16.mxu0 0
      %659 = vmatpush1.bf16.msra.mxu0 0
      %660 = vmatprep.subr.bf16.mxu0 0
      %661 = vmatpush1.bf16.msra.mxu0 0
      %662 = vmatprep.subr.bf16.mxu0 0
      %663 = vmatpush1.bf16.msra.mxu0 0
      %664 = vmatprep.subr.bf16.mxu0 0
      %665 = vmatpush1.bf16.msra.mxu0 0
      %666 = vmatprep.subr.bf16.mxu0 0
      %667 = vmatpush1.bf16.msra.mxu0 0
      %668 = vmatprep.subr.bf16.mxu0 0
      %669 = vmatpush1.bf16.msra.mxu0 0
      %670 = vmatprep.subr.bf16.mxu0 0
      %671 = vmatpush1.bf16.msra.mxu0 0
      %672 = vmatprep.subr.bf16.mxu0 0
      %673 = vmatpush1.bf16.msra.mxu0 0
      %674 = vmatprep.subr.bf16.mxu0 0
      %675 = vmatpush1.bf16.msra.mxu0 0
      %676 = vmatprep.subr.bf16.mxu0 0
      %677 = vmatpush1.bf16.msra.mxu0 0
      %678 = vmatprep.subr.bf16.mxu0 0
      %679 = vmatpush1.bf16.msra.mxu0 0
      %680 = vmatprep.subr.bf16.mxu0 0
      %681 = vmatpush1.bf16.msra.mxu0 0
      %682 = vmatprep.subr.bf16.mxu0 0
      %683 = vmatpush1.bf16.msra.mxu0 0
      %684 = vmatprep.mubr.bf16.mxu0 0
      %685 = vmatmul.mubr.bf16.gmra.mrb[0].mxu0 %v647
      %v686 = vpop.f32.mrb[0].mxu0
      %v687 = vadd.f32 0.0, %v686
      %v688 = vpop.f32.mrb[0].mxu0
      %v689 = vpop.f32.mrb[0].mxu0
      %v690 = vpop.f32.mrb[0].mxu0
      %691 = vdwg.mxu0
      %v692 = vpack.c.bf16 %v687, %v687
      %v694 = vunpack.c.l.b16 %v692
      %v695 = vpack.c.b16 %v694, %v694
      %696 = vrot.lane.b32.xlu0 %v695, 16
      %v697 = vpop.permute.xlu0 %696
      %vm699 = vcmask 191616
      %700 = vst.msk [vmem:[%s319] sm:$0xf] %vm699, %v697
      %701 = vrot.lane.b32.xlu0 %v324, 104
      %v702 = vpop.permute.xlu0 %701
      %703 = vrot.lane.b32.xlu0 %v459, 104
      %v704 = vpop.permute.xlu0 %703
      %v706 = vsel %vm344, %v702, 0
      %v709 = vsel %vm344, %v704, 0
      %711 = vmatprep.subr.bf16.mxu0 0
      %712 = vmatpush1.bf16.xpose.msra.mxu0 %v709
      %713 = vmatprep.subr.bf16.mxu0 0
      %714 = vmatpush1.bf16.xpose.msra.mxu0 0
      %715 = vmatprep.subr.bf16.mxu0 0
      %716 = vmatpush1.bf16.xpose.msra.mxu0 0
      %717 = vmatprep.subr.bf16.mxu0 0
      %718 = vmatpush1.bf16.xpose.msra.mxu0 0
      %719 = vmatprep.subr.bf16.mxu0 0
      %720 = vmatpush1.bf16.xpose.msra.mxu0 0
      %721 = vmatprep.subr.bf16.mxu0 0
      %722 = vmatpush1.bf16.xpose.msra.mxu0 0
      %723 = vmatprep.subr.bf16.mxu0 0
      %724 = vmatpush1.bf16.xpose.msra.mxu0 0
      %725 = vmatprep.subr.bf16.mxu0 0
      %726 = vmatpush1.bf16.xpose.msra.mxu0 0
      %727 = vmatprep.subr.bf16.mxu0 0
      %728 = vmatpush1.bf16.xpose.msra.mxu0 0
      %729 = vmatprep.subr.bf16.mxu0 0
      %730 = vmatpush1.bf16.xpose.msra.mxu0 0
      %731 = vmatprep.subr.bf16.mxu0 0
      %732 = vmatpush1.bf16.xpose.msra.mxu0 0
      %733 = vmatprep.subr.bf16.mxu0 0
      %734 = vmatpush1.bf16.xpose.msra.mxu0 0
      %735 = vmatprep.subr.bf16.mxu0 0
      %736 = vmatpush1.bf16.xpose.msra.mxu0 0
      %737 = vmatprep.subr.bf16.mxu0 0
      %738 = vmatpush1.bf16.xpose.msra.mxu0 0
      %739 = vmatprep.subr.bf16.mxu0 0
      %740 = vmatpush1.bf16.xpose.msra.mxu0 0
      %741 = vmatprep.subr.bf16.mxu0 0
      %742 = vmatpush1.bf16.xpose.msra.mxu0 0
      %743 = vmatprep.mubr.bf16.mxu0 0
      %744 = vmatmul.mubr.bf16.gmra.mrb[0].mxu0 %v706
      %v745 = vpop.f32.mrb[0].mxu0
      %v746 = vadd.f32 0.0, %v745
      %v747 = vpop.f32.mrb[0].mxu0
      %v748 = vpop.f32.mrb[0].mxu0
      %v749 = vpop.f32.mrb[0].mxu0
      %750 = vdwg.mxu0
      %v751 = vsel %vm343, %v746, -1e+30
      %v752 = vsel %vm344, %v751, -inf
      %753 = vmax.xlane.f32.xlu0 %v752
      %v754 = vpop.xlane.xlu0 %753
      %v755 = vsub.f32 %v751, %v754
      %v756 = vmul.f32 %v755, 1.442695
      %v757 = vpow.pop %v756
      %v758 = vsel %vm344, %v757, 0.0
      %759 = vadd.xlane.f32.xlu0 %v758
      %v760 = vpop.xlane.xlu0 %759
      %v761 = vrcp.pop %v760
      %v762 = vmul.f32 %v757, %v761
      %v763 = vpack.c.bf16 %v762, %v762
      %764 = vrot.lane.b32.xlu0 %v523, 104
      %v765 = vpop.permute.xlu0 %764
      %v767 = vsel %vm344, %v763, 0
      %v770 = vsel %vm407, %v765, 0
      %772 = vmatprep.subr.bf16.mxu0 0
      %773 = vmatpush1.bf16.msra.mxu0 %v770
      %774 = vmatprep.subr.bf16.mxu0 0
      %775 = vmatpush1.bf16.msra.mxu0 0
      %776 = vmatprep.subr.bf16.mxu0 0
      %777 = vmatpush1.bf16.msra.mxu0 0
      %778 = vmatprep.subr.bf16.mxu0 0
      %779 = vmatpush1.bf16.msra.mxu0 0
      %780 = vmatprep.subr.bf16.mxu0 0
      %781 = vmatpush1.bf16.msra.mxu0 0
      %782 = vmatprep.subr.bf16.mxu0 0
      %783 = vmatpush1.bf16.msra.mxu0 0
      %784 = vmatprep.subr.bf16.mxu0 0
      %785 = vmatpush1.bf16.msra.mxu0 0
      %786 = vmatprep.subr.bf16.mxu0 0
      %787 = vmatpush1.bf16.msra.mxu0 0
      %788 = vmatprep.subr.bf16.mxu0 0
      %789 = vmatpush1.bf16.msra.mxu0 0
      %790 = vmatprep.subr.bf16.mxu0 0
      %791 = vmatpush1.bf16.msra.mxu0 0
      %792 = vmatprep.subr.bf16.mxu0 0
      %793 = vmatpush1.bf16.msra.mxu0 0
      %794 = vmatprep.subr.bf16.mxu0 0
      %795 = vmatpush1.bf16.msra.mxu0 0
      %796 = vmatprep.subr.bf16.mxu0 0
      %797 = vmatpush1.bf16.msra.mxu0 0
      %798 = vmatprep.subr.bf16.mxu0 0
      %799 = vmatpush1.bf16.msra.mxu0 0
      %800 = vmatprep.subr.bf16.mxu0 0
      %801 = vmatpush1.bf16.msra.mxu0 0
      %802 = vmatprep.subr.bf16.mxu0 0
      %803 = vmatpush1.bf16.msra.mxu0 0
      %804 = vmatprep.mubr.bf16.mxu0 0
      %805 = vmatmul.mubr.bf16.gmra.mrb[0].mxu0 %v767
      %v806 = vpop.f32.mrb[0].mxu0
      %v807 = vadd.f32 0.0, %v806
      %v808 = vpop.f32.mrb[0].mxu0
      %v809 = vpop.f32.mrb[0].mxu0
      %v810 = vpop.f32.mrb[0].mxu0
      %811 = vdwg.mxu0
      %v812 = vpack.c.bf16 %v807, %v807
      %v814 = vunpack.c.l.b16 %v812
      %v815 = vpack.c.b16 %v814, %v814
      %816 = vrot.lane.b32.xlu0 %v815, 24
      %v817 = vpop.permute.xlu0 %816
      %vm819 = vcmask 257216
      %820 = vst.msk [vmem:[%s319] sm:$0xf] %vm819, %v817
      %p821 = scmp.lt.s32.totalorder %s20, 1
      %s822 = scalar_select %p821, %s20, 1
      %p823 = scmp.lt.s32.totalorder %s22, 0
      %s824 = scalar_select %p823, %s22, 0
      %p825 = scmp.lt.s32.totalorder %s21, 0
      %s826 = scalar_select %p825, %s21, 0
      %s827 = sadd.s32 %s826, %s824
      %s828 = sadd.s32 %s827, %s822
      %s829 = smul.addr %s828, 4
      %s830 = scalar_lea.vmem %s4, %s829
      // Predicated region
      $region37: #{encoder_forward.8} parent=35 // pred_check
        %p831 = pneg %p168
      $region38: #{encoder_forward.8} parent=35 // pred_check_branch
        %833 = sbr.rel (%p831) target = $region40
      $region39: #{encoder_forward.8} parent=35 // pred_region
        _
      $region40: #{encoder_forward.8} parent=35 // pred_fallthru
        _
    $region36: #{encoder_forward.8} parent=5 // pred_fallthru
      _
    %p834 = scmp.le.s32.totalorder 2, %s10
    // Predicated region
    $region41: #{encoder_forward.8} parent=5 // pred_check
      %p835 = pneg %p834
    $region42: #{encoder_forward.8} parent=5 // pred_check_branch
      %837 = sbr.rel (%p835) target = $region44
    $region43: #{encoder_forward.8} parent=5 // pred_region
      %s838 = ssub.s32 %s10, 2
      // Predicated region
      $region45: #{encoder_forward.8} parent=43 // pred_check
        %p839 = pneg %p174
      $region46: #{encoder_forward.8} parent=43 // pred_check_branch
        %841 = sbr.rel (%p839) target = $region48
      $region47: #{encoder_forward.8} parent=43 // pred_region
        %p842 = scmp.lt.s32.totalorder %s23, 1
        %s843 = scalar_select %p842, %s23, 1
        %p844 = scmp.lt.s32.totalorder %s25, 0
        %s845 = scalar_select %p844, %s25, 0
        %p846 = scmp.lt.s32.totalorder %s24, 0
        %s847 = scalar_select %p846, %s24, 0
        %s848 = sadd.s32 %s847, %s845
        %s849 = sadd.s32 %s848, %s843
        %s850 = smul.addr %s849, 4
        %s851 = scalar_lea.vmem %s4, %s850
      $region48: #{encoder_forward.8} parent=43 // pred_fallthru
        _
    $region44: #{encoder_forward.8} parent=5 // pred_fallthru
      _
  $region6: #{encoder_forward.8} parent=0 // loop_footer
    %s14 = sadd.s32 1, %s10
  $region7: #{encoder_forward.8} parent=0 // loop_footer_branch
    %9 = sbr.rel target = $region3
  $region8: #{encoder_forward.8} parent=0 // loop_exit
    _

</llo_original>
